<compile_context>
chip_gen: v7x
topology: tpu7x:2x2x1
jax: 0.10.0
libtpu: 0.0.40
codegen_flags: <defaults>
</compile_context>

<pallas_src>
import math
import functools

import jax
import jax.numpy as jnp
from jax.experimental import pallas as pl
from jax.experimental.pallas import tpu as pltpu

LOG2PI = math.log(2.0 * math.pi)
LANE = 128
MAX_TB = 2048  # rows per tile cap; (2048,128) f32 out block is ~1 MB — VMEM non-issue


def _round_up(n, m):
    return ((n + m - 1) // m) * m


def _cdiv(a, b):
    return -(-a // b)


# ----------------------------------------------------------------------------
# Kernel
# ----------------------------------------------------------------------------
def _vae_kernel(
    xe_ref,                                # fused (TB, x_dim + z_dim) input: [x | eps]
    ew1_ref, eb1_ref, ew2_ref, eb2_ref,    # encoder hidden layers (bf16 W, f32 b)
    mlw_ref, mlb_ref,                      # fused GaussianSample heads (mu | log_var)
    dw1_ref, db1_ref, dw2_ref, db2_ref,    # decoder hidden layers
    rw_ref, rb_ref,                        # reconstruction layer (padded to 128 lanes)
    out_ref,                               # (TB, 128): cols 0:x_dim = x_mu, col x_dim = kld
    *, z_dim, x_dim,
):
    bf16 = jnp.bfloat16
    xe = xe_ref[...]
    x = xe[:, :x_dim].astype(bf16)
    eps = xe[:, x_dim:]                    # keep eps in f32 for the KL / sampling math

    # ---------------- Encoder: Linear -> ReLU chain (bf16 MXU, f32 acc) -----
    h = jnp.dot(x, ew1_ref[...], preferred_element_type=jnp.float32) + eb1_ref[...]
    h = jnp.maximum(h, 0.0)
    h = jnp.dot(h.astype(bf16), ew2_ref[...],
                preferred_element_type=jnp.float32) + eb2_ref[...]
    h = jnp.maximum(h, 0.0)

    # ---------------- GaussianSample (fused mu|log_var head) ----------------
    ml = jnp.dot(h.astype(bf16), mlw_ref[...],
                 preferred_element_type=jnp.float32) + mlb_ref[...]
    mu = ml[:, :z_dim]
    log_var = ml[:, z_dim:]
    std = jnp.exp(0.5 * log_var)
    z = mu + std * eps

    # ---------------- KL: log q(z|x) - log p(z), simplified ------------------
    # (z - mu)^2 / (2*exp(log_var)) == 0.5*eps^2 ; the -0.5*log(2*pi) terms cancel.
    kld = jnp.sum(0.5 * (z * z - log_var - eps * eps), axis=-1, keepdims=True)

    # ---------------- Decoder: Linear -> ReLU chain, sigmoid head -----------
    d = jnp.dot(z.astype(bf16), dw1_ref[...],
                preferred_element_type=jnp.float32) + db1_ref[...]
    d = jnp.maximum(d, 0.0)
    d = jnp.dot(d.astype(bf16), dw2_ref[...],
                preferred_element_type=jnp.float32) + db2_ref[...]
    d = jnp.maximum(d, 0.0)
    # rw/rb are zero-padded to 128 output lanes -> logits already lane-dense.
    logits = jnp.dot(d.astype(bf16), rw_ref[...],
                     preferred_element_type=jnp.float32) + rb_ref[...]
    x_mu = jax.nn.sigmoid(logits)

    # Pack kld into lane `x_dim` of the dense output slab (pure VPU select).
    lane = jax.lax.broadcasted_iota(jnp.int32, x_mu.shape, dimension=1)
    out_ref[...] = jnp.where(lane == x_dim, kld, x_mu)


# ----------------------------------------------------------------------------
# Parameter init (mirrors the PyTorch module) + one-time kernel-layout prep
# ----------------------------------------------------------------------------
def _xavier_normal(key, fan_in, fan_out):
    # torch.nn.init.xavier_normal_: std = sqrt(2/(fan_in+fan_out)), W shape (out, in).
    std = math.sqrt(2.0 / (fan_in + fan_out))
    return jax.random.normal(key, (fan_out, fan_in), dtype=jnp.float32) * std


def init_vae_params(key, x_dim, h_dim, z_dim):
    ks = jax.random.split(key, 7)
    h_rev = list(reversed(h_dim))
    p = {}
    p["ew1"] = _xavier_normal(ks[0], x_dim, h_dim[0]);   p["eb1"] = jnp.zeros((h_dim[0],), jnp.float32)
    p["ew2"] = _xavier_normal(ks[1], h_dim[0], h_dim[1]); p["eb2"] = jnp.zeros((h_dim[1],), jnp.float32)
    p["mw"] = _xavier_normal(ks[2], h_dim[1], z_dim);     p["mb"] = jnp.zeros((z_dim,), jnp.float32)
    p["lw"] = _xavier_normal(ks[3], h_dim[1], z_dim);     p["lb"] = jnp.zeros((z_dim,), jnp.float32)
    p["dw1"] = _xavier_normal(ks[4], z_dim, h_rev[0]);    p["db1"] = jnp.zeros((h_rev[0],), jnp.float32)
    p["dw2"] = _xavier_normal(ks[5], h_rev[0], h_rev[1]); p["db2"] = jnp.zeros((h_rev[1],), jnp.float32)
    p["rw"] = _xavier_normal(ks[6], h_rev[1], x_dim);     p["rb"] = jnp.zeros((x_dim,), jnp.float32)
    return p


def prepare_kernel_params(params, x_dim, weight_dtype=jnp.bfloat16):
    """One-time layout prep: transpose to (in,out), cast weights to bf16,
    fuse mu|log_var head, pad the reconstruction layer to 128 output lanes."""
    out_pad = max(LANE, _round_up(x_dim + 1, LANE))

    def t(w):                      # (out,in) torch layout -> (in,out) MXU layout
        return jnp.transpose(w).astype(weight_dtype)

    def row(v):                    # biases stay f32 (added after f32 accumulation)
        return v.reshape(1, -1).astype(jnp.float32)

    kp = {
        "ew1": t(params["ew1"]), "eb1": row(params["eb1"]),
        "ew2": t(params["ew2"]), "eb2": row(params["eb2"]),
        # Fused (mu | log_var) head: (h_dim[-1], 2*z_dim)
        "mlw": jnp.concatenate([t(params["mw"]), t(params["lw"])], axis=1),
        "mlb": row(jnp.concatenate([params["mb"], params["lb"]])),
        "dw1": t(params["dw1"]), "db1": row(params["db1"]),
        "dw2": t(params["dw2"]), "db2": row(params["db2"]),
        # Reconstruction padded to a lane-dense 128-wide output.
        "rw": jnp.pad(t(params["rw"]), ((0, 0), (0, out_pad - x_dim))),
        "rb": row(jnp.pad(params["rb"], (0, out_pad - x_dim))),
    }
    return kp, out_pad


# ----------------------------------------------------------------------------
# Chip-aware tiling choice
# ----------------------------------------------------------------------------
@functools.lru_cache(maxsize=1)
def _multi_tensorcore_chip():
    """True on chips with >1 TensorCore behind one Pallas device (v4/v5p/v7x)."""
    try:
        kind = jax.devices()[0].device_kind.lower()
    except Exception:
        return False
    single_tc = any(tag in kind for tag in ("v2", "v3", "lite", "v5e", "v6e"))
    return not single_tc


def _choose_tiling(b, max_tb=MAX_TB):
    multi = _multi_tensorcore_chip()
    # Single-TC (v5e/v6e): one grid step -> no per-step pipeline overhead.
    # Multi-TC (v4/v5p/v7x): 2 "parallel" steps so both cores get a tile.
    steps = 2 if (multi and b >= 16) else 1
    tb = _round_up(_cdiv(b, steps), 8)
    if tb > max_tb:                       # very large batches: more steps
        tb = max_tb
        steps = _cdiv(b, tb)
        if multi and steps % 2:
            steps += 1                    # even step count shards evenly on 2 TCs
    return tb, steps


# ----------------------------------------------------------------------------
# Forward wrapper
# ----------------------------------------------------------------------------
_WEIGHT_KEYS = ("ew1", "eb1", "ew2", "eb2", "mlw", "mlb",
                "dw1", "db1", "dw2", "db2", "rw", "rb")


@functools.partial(jax.jit, static_argnames=("x_dim", "z_dim", "out_pad", "tb", "steps"))
def _vae_forward_impl(kparams, x, eps, *, x_dim, z_dim, out_pad, tb, steps):
    b = x.shape[0]
    bp = tb * steps

    # Fuse x and eps into one denser input stream (one DMA per tile).
    xe = jnp.concatenate([x, eps], axis=1)
    if bp != b:
        xe = jnp.pad(xe, ((0, bp - b), (0, 0)))

    weights = tuple(kparams[k] for k in _WEIGHT_KEYS)

    # xe / out are blocked over batch; weights stay VMEM-resident (block idx (0,0)).
    in_specs = [pl.BlockSpec((tb, x_dim + z_dim), lambda i: (i, 0))] + \
               [pl.BlockSpec(w.shape, lambda i: (0, 0)) for w in weights]

    out = pl.pallas_call(
        functools.partial(_vae_kernel, z_dim=z_dim, x_dim=x_dim),
        out_shape=jax.ShapeDtypeStruct((bp, out_pad), jnp.float32),
        grid=(steps,),
        in_specs=in_specs,
        out_specs=pl.BlockSpec((tb, out_pad), lambda i: (i, 0)),
        compiler_params=pltpu.CompilerParams(dimension_semantics=("parallel",)),
    )(xe, *weights)

    x_mu = out[:b, :x_dim]
    kld = out[:b, x_dim]
    return x_mu, kld


def vae_forward(kparams, x, eps, *, x_dim, z_dim, out_pad):
    """Full VAE forward in one Pallas kernel.  Returns (x_mu [B, x_dim], kld [B])."""
    tb, steps = _choose_tiling(x.shape[0])
    return _vae_forward_impl(kparams, x, eps, x_dim=x_dim, z_dim=z_dim,
                             out_pad=out_pad, tb=tb, steps=steps)


# ----------------------------------------------------------------------------
# Pure-JAX reference (mirrors the PyTorch semantics; matmul_dtype controls
# whether the matmul operands are exact f32 or bf16 like the kernel's MXU path)
# ----------------------------------------------------------------------------
def vae_forward_ref(params, x, eps, *, matmul_dtype=jnp.float32):
    def lin(a, w, b):
        return jnp.dot(a.astype(matmul_dtype), jnp.transpose(w).astype(matmul_dtype),
                       preferred_element_type=jnp.float32) + b

    h = jax.nn.relu(lin(x, params["ew1"], params["eb1"]))
    h = jax.nn.relu(lin(h, params["ew2"], params["eb2"]))
    mu = lin(h, params["mw"], params["mb"])
    log_var = lin(h, params["lw"], params["lb"])
    z = mu + jnp.exp(0.5 * log_var) * eps
    qz = jnp.sum(-0.5 * LOG2PI - 0.5 * log_var
                 - (z - mu) ** 2 / (2.0 * jnp.exp(log_var)), axis=-1)
    pz = jnp.sum(-0.5 * LOG2PI - 0.5 * z * z, axis=-1)
    kld = qz - pz
    d = jax.nn.relu(lin(z, params["dw1"], params["db1"]))
    d = jax.nn.relu(lin(d, params["dw2"], params["db2"]))
    x_mu = jax.nn.sigmoid(lin(d, params["rw"], params["rb"]))
    return x_mu, kld


if __name__ == "__main__":
    # Config consistent with the module: config={'h_dim':[64,32],'z_dim':16,'as_beta':False}
    B, X_DIM, Z_DIM = 256, 32, 16
    H_DIM = [64, 32]

    key = jax.random.PRNGKey(0)
    kp_key, kx, ke = jax.random.split(key, 3)

    params = init_vae_params(kp_key, X_DIM, H_DIM, Z_DIM)
    kparams, OUT_PAD = prepare_kernel_params(params, X_DIM)

    x = jax.random.uniform(kx, (B, X_DIM), dtype=jnp.float32)
    # Reparameterization noise eps ~ N(0, I), generated outside the kernel.
    # TODO(synk): could be drawn in-kernel via pltpu.prng_seed/stateful_normal if
    # bit-parity with external noise is not required.
    eps = jax.random.normal(ke, (B, Z_DIM), dtype=jnp.float32)

    x_mu, kld = vae_forward(kparams, x, eps, x_dim=X_DIM, z_dim=Z_DIM, out_pad=OUT_PAD)
    jax.block_until_ready((x_mu, kld))
    assert x_mu.shape == (B, X_DIM) and kld.shape == (B,)

    # (1) Tight check vs a plain-JAX reference that uses the same bf16 matmul
    #     operands with f32 accumulation (the kernel's intended math).
    x_mu_bf, kld_bf = vae_forward_ref(params, x, eps, matmul_dtype=jnp.bfloat16)
    assert jnp.allclose(x_mu, x_mu_bf, atol=2e-3, rtol=2e-3)
    assert jnp.allclose(kld, kld_bf, atol=2e-2, rtol=2e-2)

    # (2) Fidelity vs the exact f32 module semantics (loosened per the review's
    #     bf16 precision caveat).
    x_mu_ref, kld_ref = vae_forward_ref(params, x, eps)
    err_x = float(jnp.max(jnp.abs(x_mu - x_mu_ref)))
    err_k = float(jnp.max(jnp.abs(kld - kld_ref)))
    assert err_x < 2e-2, f"x_mu max err {err_x}"
    assert err_k < 0.1 * (1.0 + float(jnp.max(jnp.abs(kld_ref)))), f"kld max err {err_k}"

    # (3) Exercise the batch-padding / small-batch path as well.
    x2, eps2 = x[:37], eps[:37]
    x_mu2, kld2 = vae_forward(kparams, x2, eps2, x_dim=X_DIM, z_dim=Z_DIM, out_pad=OUT_PAD)
    jax.block_until_ready((x_mu2, kld2))
    x_mu2_bf, kld2_bf = vae_forward_ref(params, x2, eps2, matmul_dtype=jnp.bfloat16)
    assert x_mu2.shape == (37, X_DIM) and kld2.shape == (37,)
    assert jnp.allclose(x_mu2, x_mu2_bf, atol=2e-3, rtol=2e-3)
    assert jnp.allclose(kld2, kld2_bf, atol=2e-2, rtol=2e-2)

    print("KERNEL_OK")
</pallas_src>

<mosaic_0001>
module attributes {stable_mosaic.version = 11 : i64} {
  func.func @_vae_kernel(%arg0: i32, %arg1: memref<128x48xf32, #tpu.memory_space<vmem>>, %arg2: memref<32x64xbf16, #tpu.memory_space<vmem>>, %arg3: memref<1x64xf32, #tpu.memory_space<vmem>>, %arg4: memref<64x32xbf16, #tpu.memory_space<vmem>>, %arg5: memref<1x32xf32, #tpu.memory_space<vmem>>, %arg6: memref<32x32xbf16, #tpu.memory_space<vmem>>, %arg7: memref<1x32xf32, #tpu.memory_space<vmem>>, %arg8: memref<16x32xbf16, #tpu.memory_space<vmem>>, %arg9: memref<1x32xf32, #tpu.memory_space<vmem>>, %arg10: memref<32x64xbf16, #tpu.memory_space<vmem>>, %arg11: memref<1x64xf32, #tpu.memory_space<vmem>>, %arg12: memref<64x128xbf16, #tpu.memory_space<vmem>>, %arg13: memref<1x128xf32, #tpu.memory_space<vmem>>, %arg14: memref<128x128xf32, #tpu.memory_space<vmem>>) attributes {dimension_semantics = [#tpu.dimension_semantics<parallel>], iteration_bounds = array<i64: 2>, scalar_prefetch = 0 : i64, scratch_operands = 0 : i64, tpu.core_type = #tpu.core_type<tc>, window_params = [{transform_indices = @transform_0, window_bounds = array<i64: 128, 48>}, {pipeline_mode = #tpu.pipeline_mode<synchronous>, transform_indices = @transform_1, window_bounds = array<i64: 32, 64>}, {pipeline_mode = #tpu.pipeline_mode<synchronous>, transform_indices = @transform_2, window_bounds = array<i64: 1, 64>}, {pipeline_mode = #tpu.pipeline_mode<synchronous>, transform_indices = @transform_3, window_bounds = array<i64: 64, 32>}, {pipeline_mode = #tpu.pipeline_mode<synchronous>, transform_indices = @transform_4, window_bounds = array<i64: 1, 32>}, {pipeline_mode = #tpu.pipeline_mode<synchronous>, transform_indices = @transform_5, window_bounds = array<i64: 32, 32>}, {pipeline_mode = #tpu.pipeline_mode<synchronous>, transform_indices = @transform_6, window_bounds = array<i64: 1, 32>}, {pipeline_mode = #tpu.pipeline_mode<synchronous>, transform_indices = @transform_7, window_bounds = array<i64: 16, 32>}, {pipeline_mode = #tpu.pipeline_mode<synchronous>, transform_indices = @transform_8, window_bounds = array<i64: 1, 32>}, {pipeline_mode = #tpu.pipeline_mode<synchronous>, transform_indices = @transform_9, window_bounds = array<i64: 32, 64>}, {pipeline_mode = #tpu.pipeline_mode<synchronous>, transform_indices = @transform_10, window_bounds = array<i64: 1, 64>}, {pipeline_mode = #tpu.pipeline_mode<synchronous>, transform_indices = @transform_11, window_bounds = array<i64: 64, 128>}, {pipeline_mode = #tpu.pipeline_mode<synchronous>, transform_indices = @transform_12, window_bounds = array<i64: 1, 128>}, {transform_indices = @transform_13, window_bounds = array<i64: 128, 128>}]} {
    %c0 = arith.constant 0 : index
    %c0_0 = arith.constant 0 : index
    %0 = vector.load %arg1[%c0, %c0_0] : memref<128x48xf32, #tpu.memory_space<vmem>>, vector<128x48xf32>
    %1 = vector.extract_strided_slice %0 {offsets = [0, 0], sizes = [128, 32], strides = [1, 1]} : vector<128x48xf32> to vector<128x32xf32>
    %2 = arith.truncf %1 : vector<128x32xf32> to vector<128x32xbf16>
    %3 = vector.extract_strided_slice %0 {offsets = [0, 32], sizes = [128, 16], strides = [1, 1]} : vector<128x48xf32> to vector<128x16xf32>
    %c0_1 = arith.constant 0 : index
    %c0_2 = arith.constant 0 : index
    %4 = vector.load %arg2[%c0_1, %c0_2] : memref<32x64xbf16, #tpu.memory_space<vmem>>, vector<32x64xbf16>
    %cst = arith.constant dense<0.000000e+00> : vector<128x64xf32>
    %5 = tpu.matmul %2, %4, %cst {dimension_numbers = #tpu.dot_dimension_numbers<[1], [0], [0], [1], [0, 0, 1, 1], [], []>} : vector<128x32xbf16>, vector<32x64xbf16>, vector<128x64xf32> -> vector<128x64xf32>
    %c0_3 = arith.constant 0 : index
    %c0_4 = arith.constant 0 : index
    %6 = vector.load %arg3[%c0_3, %c0_4] : memref<1x64xf32, #tpu.memory_space<vmem>>, vector<1x64xf32>
    %7 = vector.broadcast %6 : vector<1x64xf32> to vector<128x64xf32>
    %8 = arith.addf %5, %7 : vector<128x64xf32>
    %cst_5 = arith.constant 0.000000e+00 : f32
    %9 = vector.broadcast %cst_5 : f32 to vector<128x64xf32>
    %10 = arith.maximumf %8, %9 : vector<128x64xf32>
    %11 = arith.truncf %10 : vector<128x64xf32> to vector<128x64xbf16>
    %c0_6 = arith.constant 0 : index
    %c0_7 = arith.constant 0 : index
    %12 = vector.load %arg4[%c0_6, %c0_7] : memref<64x32xbf16, #tpu.memory_space<vmem>>, vector<64x32xbf16>
    %cst_8 = arith.constant dense<0.000000e+00> : vector<128x32xf32>
    %13 = tpu.matmul %11, %12, %cst_8 {dimension_numbers = #tpu.dot_dimension_numbers<[1], [0], [0], [1], [0, 0, 1, 1], [], []>} : vector<128x64xbf16>, vector<64x32xbf16>, vector<128x32xf32> -> vector<128x32xf32>
    %c0_9 = arith.constant 0 : index
    %c0_10 = arith.constant 0 : index
    %14 = vector.load %arg5[%c0_9, %c0_10] : memref<1x32xf32, #tpu.memory_space<vmem>>, vector<1x32xf32>
    %15 = vector.broadcast %14 : vector<1x32xf32> to vector<128x32xf32>
    %16 = arith.addf %13, %15 : vector<128x32xf32>
    %cst_11 = arith.constant 0.000000e+00 : f32
    %17 = vector.broadcast %cst_11 : f32 to vector<128x32xf32>
    %18 = arith.maximumf %16, %17 : vector<128x32xf32>
    %19 = arith.truncf %18 : vector<128x32xf32> to vector<128x32xbf16>
    %c0_12 = arith.constant 0 : index
    %c0_13 = arith.constant 0 : index
    %20 = vector.load %arg6[%c0_12, %c0_13] : memref<32x32xbf16, #tpu.memory_space<vmem>>, vector<32x32xbf16>
    %cst_14 = arith.constant dense<0.000000e+00> : vector<128x32xf32>
    %21 = tpu.matmul %19, %20, %cst_14 {dimension_numbers = #tpu.dot_dimension_numbers<[1], [0], [0], [1], [0, 0, 1, 1], [], []>} : vector<128x32xbf16>, vector<32x32xbf16>, vector<128x32xf32> -> vector<128x32xf32>
    %c0_15 = arith.constant 0 : index
    %c0_16 = arith.constant 0 : index
    %22 = vector.load %arg7[%c0_15, %c0_16] : memref<1x32xf32, #tpu.memory_space<vmem>>, vector<1x32xf32>
    %23 = vector.broadcast %22 : vector<1x32xf32> to vector<128x32xf32>
    %24 = arith.addf %21, %23 : vector<128x32xf32>
    %25 = vector.extract_strided_slice %24 {offsets = [0, 0], sizes = [128, 16], strides = [1, 1]} : vector<128x32xf32> to vector<128x16xf32>
    %26 = vector.extract_strided_slice %24 {offsets = [0, 16], sizes = [128, 16], strides = [1, 1]} : vector<128x32xf32> to vector<128x16xf32>
    %cst_17 = arith.constant 5.000000e-01 : f32
    %27 = vector.broadcast %cst_17 : f32 to vector<128x16xf32>
    %28 = arith.mulf %27, %26 : vector<128x16xf32>
    %29 = math.exp %28 : vector<128x16xf32>
    %30 = arith.mulf %29, %3 : vector<128x16xf32>
    %31 = arith.addf %25, %30 : vector<128x16xf32>
    %32 = arith.mulf %31, %31 : vector<128x16xf32>
    %33 = arith.subf %32, %26 : vector<128x16xf32>
    %34 = arith.mulf %3, %3 : vector<128x16xf32>
    %35 = arith.subf %33, %34 : vector<128x16xf32>
    %cst_18 = arith.constant 5.000000e-01 : f32
    %36 = vector.broadcast %cst_18 : f32 to vector<128x16xf32>
    %37 = arith.mulf %36, %35 : vector<128x16xf32>
    %cst_19 = arith.constant dense<0.000000e+00> : vector<128xf32>
    %38 = vector.multi_reduction <add>, %37, %cst_19 [1] : vector<128x16xf32> to vector<128xf32>
    %39 = vector.shape_cast %38 : vector<128xf32> to vector<128x1xf32>
    %40 = arith.truncf %31 : vector<128x16xf32> to vector<128x16xbf16>
    %c0_20 = arith.constant 0 : index
    %c0_21 = arith.constant 0 : index
    %41 = vector.load %arg8[%c0_20, %c0_21] : memref<16x32xbf16, #tpu.memory_space<vmem>>, vector<16x32xbf16>
    %cst_22 = arith.constant dense<0.000000e+00> : vector<128x32xf32>
    %42 = tpu.matmul %40, %41, %cst_22 {dimension_numbers = #tpu.dot_dimension_numbers<[1], [0], [0], [1], [0, 0, 1, 1], [], []>} : vector<128x16xbf16>, vector<16x32xbf16>, vector<128x32xf32> -> vector<128x32xf32>
    %c0_23 = arith.constant 0 : index
    %c0_24 = arith.constant 0 : index
    %43 = vector.load %arg9[%c0_23, %c0_24] : memref<1x32xf32, #tpu.memory_space<vmem>>, vector<1x32xf32>
    %44 = vector.broadcast %43 : vector<1x32xf32> to vector<128x32xf32>
    %45 = arith.addf %42, %44 : vector<128x32xf32>
    %cst_25 = arith.constant 0.000000e+00 : f32
    %46 = vector.broadcast %cst_25 : f32 to vector<128x32xf32>
    %47 = arith.maximumf %45, %46 : vector<128x32xf32>
    %48 = arith.truncf %47 : vector<128x32xf32> to vector<128x32xbf16>
    %c0_26 = arith.constant 0 : index
    %c0_27 = arith.constant 0 : index
    %49 = vector.load %arg10[%c0_26, %c0_27] : memref<32x64xbf16, #tpu.memory_space<vmem>>, vector<32x64xbf16>
    %cst_28 = arith.constant dense<0.000000e+00> : vector<128x64xf32>
    %50 = tpu.matmul %48, %49, %cst_28 {dimension_numbers = #tpu.dot_dimension_numbers<[1], [0], [0], [1], [0, 0, 1, 1], [], []>} : vector<128x32xbf16>, vector<32x64xbf16>, vector<128x64xf32> -> vector<128x64xf32>
    %c0_29 = arith.constant 0 : index
    %c0_30 = arith.constant 0 : index
    %51 = vector.load %arg11[%c0_29, %c0_30] : memref<1x64xf32, #tpu.memory_space<vmem>>, vector<1x64xf32>
    %52 = vector.broadcast %51 : vector<1x64xf32> to vector<128x64xf32>
    %53 = arith.addf %50, %52 : vector<128x64xf32>
    %cst_31 = arith.constant 0.000000e+00 : f32
    %54 = vector.broadcast %cst_31 : f32 to vector<128x64xf32>
    %55 = arith.maximumf %53, %54 : vector<128x64xf32>
    %56 = arith.truncf %55 : vector<128x64xf32> to vector<128x64xbf16>
    %c0_32 = arith.constant 0 : index
    %c0_33 = arith.constant 0 : index
    %57 = vector.load %arg12[%c0_32, %c0_33] : memref<64x128xbf16, #tpu.memory_space<vmem>>, vector<64x128xbf16>
    %cst_34 = arith.constant dense<0.000000e+00> : vector<128x128xf32>
    %58 = tpu.matmul %56, %57, %cst_34 {dimension_numbers = #tpu.dot_dimension_numbers<[1], [0], [0], [1], [0, 0, 1, 1], [], []>} : vector<128x64xbf16>, vector<64x128xbf16>, vector<128x128xf32> -> vector<128x128xf32>
    %c0_35 = arith.constant 0 : index
    %c0_36 = arith.constant 0 : index
    %59 = vector.load %arg13[%c0_35, %c0_36] : memref<1x128xf32, #tpu.memory_space<vmem>>, vector<1x128xf32>
    %60 = vector.broadcast %59 : vector<1x128xf32> to vector<128x128xf32>
    %61 = arith.addf %58, %60 : vector<128x128xf32>
    %62 = arith.negf %61 : vector<128x128xf32>
    %63 = math.exp %62 : vector<128x128xf32>
    %cst_37 = arith.constant 1.000000e+00 : f32
    %64 = vector.broadcast %cst_37 : f32 to vector<128x128xf32>
    %65 = arith.addf %64, %63 : vector<128x128xf32>
    %66 = arith.divf %64, %65 : vector<128x128xf32>
    %67 = tpu.iota {dimensions = array<i32: 1>} : vector<128x128xi32>
    %c32_i32 = arith.constant 32 : i32
    %68 = vector.broadcast %c32_i32 : i32 to vector<128x128xi32>
    %69 = arith.cmpi eq, %67, %68 : vector<128x128xi32>
    %70 = vector.shape_cast %39 : vector<128x1xf32> to vector<128x1xf32>
    %71 = vector.broadcast %70 : vector<128x1xf32> to vector<128x128xf32>
    %72 = arith.select %69, %71, %66 : vector<128x128xi1>, vector<128x128xf32>
    %c0_38 = arith.constant 0 : index
    %c0_39 = arith.constant 0 : index
    %73 = vector.load %arg14[%c0_38, %c0_39] : memref<128x128xf32, #tpu.memory_space<vmem>>, vector<128x128xf32>
    tpu.vector_store %arg14[%c0_38, %c0_39], %72 {strides = array<i32>} : memref<128x128xf32, #tpu.memory_space<vmem>>, vector<128x128xf32>,
    return
  }
  func.func @transform_0(%arg0: i32) -> (i32, i32) {
    %c0_i32 = arith.constant 0 : i32
    %c0_i32_0 = arith.constant 0 : i32
    return %arg0, %c0_i32 : i32, i32
  }
  func.func @transform_1(%arg0: i32) -> (i32, i32) {
    %c0_i32 = arith.constant 0 : i32
    %c0_i32_0 = arith.constant 0 : i32
    %c0_i32_1 = arith.constant 0 : i32
    return %c0_i32, %c0_i32_0 : i32, i32
  }
  func.func @transform_2(%arg0: i32) -> (i32, i32) {
    %c0_i32 = arith.constant 0 : i32
    %c0_i32_0 = arith.constant 0 : i32
    %c0_i32_1 = arith.constant 0 : i32
    return %c0_i32, %c0_i32_0 : i32, i32
  }
  func.func @transform_3(%arg0: i32) -> (i32, i32) {
    %c0_i32 = arith.constant 0 : i32
    %c0_i32_0 = arith.constant 0 : i32
    %c0_i32_1 = arith.constant 0 : i32
    return %c0_i32, %c0_i32_0 : i32, i32
  }
  func.func @transform_4(%arg0: i32) -> (i32, i32) {
    %c0_i32 = arith.constant 0 : i32
    %c0_i32_0 = arith.constant 0 : i32
    %c0_i32_1 = arith.constant 0 : i32
    return %c0_i32, %c0_i32_0 : i32, i32
  }
  func.func @transform_5(%arg0: i32) -> (i32, i32) {
    %c0_i32 = arith.constant 0 : i32
    %c0_i32_0 = arith.constant 0 : i32
    %c0_i32_1 = arith.constant 0 : i32
    return %c0_i32, %c0_i32_0 : i32, i32
  }
  func.func @transform_6(%arg0: i32) -> (i32, i32) {
    %c0_i32 = arith.constant 0 : i32
    %c0_i32_0 = arith.constant 0 : i32
    %c0_i32_1 = arith.constant 0 : i32
    return %c0_i32, %c0_i32_0 : i32, i32
  }
  func.func @transform_7(%arg0: i32) -> (i32, i32) {
    %c0_i32 = arith.constant 0 : i32
    %c0_i32_0 = arith.constant 0 : i32
    %c0_i32_1 = arith.constant 0 : i32
    return %c0_i32, %c0_i32_0 : i32, i32
  }
  func.func @transform_8(%arg0: i32) -> (i32, i32) {
    %c0_i32 = arith.constant 0 : i32
    %c0_i32_0 = arith.constant 0 : i32
    %c0_i32_1 = arith.constant 0 : i32
    return %c0_i32, %c0_i32_0 : i32, i32
  }
  func.func @transform_9(%arg0: i32) -> (i32, i32) {
    %c0_i32 = arith.constant 0 : i32
    %c0_i32_0 = arith.constant 0 : i32
    %c0_i32_1 = arith.constant 0 : i32
    return %c0_i32, %c0_i32_0 : i32, i32
  }
  func.func @transform_10(%arg0: i32) -> (i32, i32) {
    %c0_i32 = arith.constant 0 : i32
    %c0_i32_0 = arith.constant 0 : i32
    %c0_i32_1 = arith.constant 0 : i32
    return %c0_i32, %c0_i32_0 : i32, i32
  }
  func.func @transform_11(%arg0: i32) -> (i32, i32) {
    %c0_i32 = arith.constant 0 : i32
    %c0_i32_0 = arith.constant 0 : i32
    %c0_i32_1 = arith.constant 0 : i32
    return %c0_i32, %c0_i32_0 : i32, i32
  }
  func.func @transform_12(%arg0: i32) -> (i32, i32) {
    %c0_i32 = arith.constant 0 : i32
    %c0_i32_0 = arith.constant 0 : i32
    %c0_i32_1 = arith.constant 0 : i32
    return %c0_i32, %c0_i32_0 : i32, i32
  }
  func.func @transform_13(%arg0: i32) -> (i32, i32) {
    %c0_i32 = arith.constant 0 : i32
    %c0_i32_0 = arith.constant 0 : i32
    return %arg0, %c0_i32 : i32, i32
  }
}

</mosaic_0001>

<llo_original>
// kernel: _vae_forward_impl.1
$region0: #{_vae_forward_impl.1}
  #allocation0 [shape = 'u32[]', space=smem, size = 0x4, offset = 0x4, fixed_abs, tag = 'smem constant byte address 0x4 - core index']
  #allocation1 [shape = 'u32[144,128]{1,0:T(1,128)}', space=vmem, size = 0x12000, scoped, tag = 'internal scratch']
  %s0 = inlined_call_operand.vmem [shape: f32[256,48], index: 0, kind: input, shape index: {}]
  %s1 = inlined_call_operand.vmem [shape: bf16[32,64], index: 1, kind: input, shape index: {}]
  %s2 = inlined_call_operand.vmem [shape: f32[1,64], index: 2, kind: input, shape index: {}]
  %s3 = inlined_call_operand.vmem [shape: bf16[64,32], index: 3, kind: input, shape index: {}]
  %s4 = inlined_call_operand.vmem [shape: f32[1,32], index: 4, kind: input, shape index: {}]
  %s5 = inlined_call_operand.vmem [shape: bf16[32,32], index: 5, kind: input, shape index: {}]
  %s6 = inlined_call_operand.vmem [shape: f32[1,32], index: 6, kind: input, shape index: {}]
  %s7 = inlined_call_operand.vmem [shape: bf16[16,32], index: 7, kind: input, shape index: {}]
  %s8 = inlined_call_operand.vmem [shape: f32[1,32], index: 8, kind: input, shape index: {}]
  %s9 = inlined_call_operand.vmem [shape: bf16[32,64], index: 9, kind: input, shape index: {}]
  %s10 = inlined_call_operand.vmem [shape: f32[1,64], index: 10, kind: input, shape index: {}]
  %s11 = inlined_call_operand.vmem [shape: bf16[64,128], index: 11, kind: input, shape index: {}]
  %s12 = inlined_call_operand.vmem [shape: f32[1,128], index: 12, kind: input, shape index: {}]
  %s13 = inlined_call_operand.vmem [shape: f32[256,128], index: 13, kind: output, shape index: {}]
  %s14 = sld [smem:[#allocation0]]
  $region85: #{_vae_forward_impl.1} parent=0
    _
  %s16 = ssub.s32 1, %s14
  %s17 = scalar_select 0, %s16, %s14
  loop: start=0, step=1, limit=4
  $region2: #{_vae_forward_impl.1} parent=0 // loop_pre_header
    _
  $region3: #{_vae_forward_impl.1} parent=0 // loop_header
    %s19 = sphi 0, %s23
    %p20 = scmp.ge.s32.totalorder %s19, 4
    %s29 = sphi 0, %s31
    %s32 = sphi 0, %s29
    %s33 = sphi 0, %s32
    %s49 = sphi 0, %s33
    %s53 = sphi 0, %s53
    %s55 = sphi 0, %s53
    %s56 = sphi 0, %s55
    %s70 = sphi 0, %s56
    %s74 = sphi 0, %s74
    %s76 = sphi 0, %s74
    %s77 = sphi 0, %s76
    %s91 = sphi 0, %s77
    %s95 = sphi 0, %s95
    %s97 = sphi 0, %s95
    %s98 = sphi 0, %s97
    %s112 = sphi 0, %s98
    %s116 = sphi 0, %s116
    %s118 = sphi 0, %s116
    %s119 = sphi 0, %s118
    %s133 = sphi 0, %s119
    %s137 = sphi 0, %s137
    %s139 = sphi 0, %s137
    %s140 = sphi 0, %s139
    %s154 = sphi 0, %s140
    %s158 = sphi 0, %s158
    %s160 = sphi 0, %s158
    %s161 = sphi 0, %s160
    %s175 = sphi 0, %s161
    %s179 = sphi 0, %s179
    %s181 = sphi 0, %s179
    %s182 = sphi 0, %s181
    %s196 = sphi 0, %s182
    %s200 = sphi 0, %s200
    %s202 = sphi 0, %s200
    %s203 = sphi 0, %s202
    %s217 = sphi 0, %s203
    %s221 = sphi 0, %s221
    %s223 = sphi 0, %s221
    %s224 = sphi 0, %s223
    %s238 = sphi 0, %s224
    %s242 = sphi 0, %s242
    %s244 = sphi 0, %s242
    %s245 = sphi 0, %s244
    %s259 = sphi 0, %s245
    %s263 = sphi 0, %s263
    %s265 = sphi 0, %s263
    %s266 = sphi 0, %s265
    %s280 = sphi 0, %s266
    %s284 = sphi 0, %s284
    %s286 = sphi 0, %s284
    %s287 = sphi 0, %s286
    %s301 = sphi 0, %s287
    %s307 = sphi 0, %s309
    %s310 = sphi 0, %s307
    %s311 = sphi 0, %s310
    %s327 = sphi 0, %s311
  $region4: #{_vae_forward_impl.1} parent=0 // loop_header_branch
    %22 = sbr.rel (%p20) target = $region8
  $region5: #{_vae_forward_impl.1} parent=0 // loop_body
    %s24 = ssub.s32 %s19, 1
    %s25 = ssub.s32 %s19, 2
    %s26 = sadd.s32 %s19, 1
    %s27 = ssub.s32 %s19, %s26
    %p28 = scmp.eq.s32.totalorder %s27, 0
    %s30 = sadd.s32 %s29, 1
    %s31 = scalar_select %p28, %s29, %s30
    %p34 = pneg %p28
    %p35 = scmp.eq.s32.totalorder %s19, 1
    %p36 = por %p34, %p35
    %p37 = scmp.ne.s32.totalorder %s29, %s32
    %p38 = scmp.eq.s32.totalorder %s19, 0
    %p39 = por %p37, %p38
    %p40 = scmp.ne.s32.totalorder %s29, %s32
    %p41 = scmp.eq.s32.totalorder %s24, 1
    %p42 = por %p40, %p41
    %p43 = scmp.ne.s32.totalorder %s32, %s33
    %p44 = scmp.eq.s32.totalorder %s24, 0
    %p45 = por %p43, %p44
    %p46 = scmp.ne.s32.totalorder %s32, %s33
    %p47 = scmp.eq.s32.totalorder %s25, 1
    %p48 = por %p46, %p47
    %p50 = scmp.ne.s32.totalorder %s33, %s49
    %p51 = scmp.eq.s32.totalorder %s25, 0
    %p52 = por %p50, %p51
    %s54 = sadd.s32 %s53, 1
    %p57 = scmp.eq.s32.totalorder %s19, 1
    %p58 = scmp.ne.s32.totalorder %s53, %s55
    %p59 = scmp.eq.s32.totalorder %s19, 0
    %p60 = por %p58, %p59
    %p61 = scmp.ne.s32.totalorder %s53, %s55
    %p62 = scmp.eq.s32.totalorder %s24, 1
    %p63 = por %p61, %p62
    %p64 = scmp.ne.s32.totalorder %s55, %s56
    %p65 = scmp.eq.s32.totalorder %s24, 0
    %p66 = por %p64, %p65
    %p67 = scmp.ne.s32.totalorder %s55, %s56
    %p68 = scmp.eq.s32.totalorder %s25, 1
    %p69 = por %p67, %p68
    %p71 = scmp.ne.s32.totalorder %s56, %s70
    %p72 = scmp.eq.s32.totalorder %s25, 0
    %p73 = por %p71, %p72
    %s75 = sadd.s32 %s74, 1
    %p78 = scmp.eq.s32.totalorder %s19, 1
    %p79 = scmp.ne.s32.totalorder %s74, %s76
    %p80 = scmp.eq.s32.totalorder %s19, 0
    %p81 = por %p79, %p80
    %p82 = scmp.ne.s32.totalorder %s74, %s76
    %p83 = scmp.eq.s32.totalorder %s24, 1
    %p84 = por %p82, %p83
    %p85 = scmp.ne.s32.totalorder %s76, %s77
    %p86 = scmp.eq.s32.totalorder %s24, 0
    %p87 = por %p85, %p86
    %p88 = scmp.ne.s32.totalorder %s76, %s77
    %p89 = scmp.eq.s32.totalorder %s25, 1
    %p90 = por %p88, %p89
    %p92 = scmp.ne.s32.totalorder %s77, %s91
    %p93 = scmp.eq.s32.totalorder %s25, 0
    %p94 = por %p92, %p93
    %s96 = sadd.s32 %s95, 1
    %p99 = scmp.eq.s32.totalorder %s19, 1
    %p100 = scmp.ne.s32.totalorder %s95, %s97
    %p101 = scmp.eq.s32.totalorder %s19, 0
    %p102 = por %p100, %p101
    %p103 = scmp.ne.s32.totalorder %s95, %s97
    %p104 = scmp.eq.s32.totalorder %s24, 1
    %p105 = por %p103, %p104
    %p106 = scmp.ne.s32.totalorder %s97, %s98
    %p107 = scmp.eq.s32.totalorder %s24, 0
    %p108 = por %p106, %p107
    %p109 = scmp.ne.s32.totalorder %s97, %s98
    %p110 = scmp.eq.s32.totalorder %s25, 1
    %p111 = por %p109, %p110
    %p113 = scmp.ne.s32.totalorder %s98, %s112
    %p114 = scmp.eq.s32.totalorder %s25, 0
    %p115 = por %p113, %p114
    %s117 = sadd.s32 %s116, 1
    %p120 = scmp.eq.s32.totalorder %s19, 1
    %p121 = scmp.ne.s32.totalorder %s116, %s118
    %p122 = scmp.eq.s32.totalorder %s19, 0
    %p123 = por %p121, %p122
    %p124 = scmp.ne.s32.totalorder %s116, %s118
    %p125 = scmp.eq.s32.totalorder %s24, 1
    %p126 = por %p124, %p125
    %p127 = scmp.ne.s32.totalorder %s118, %s119
    %p128 = scmp.eq.s32.totalorder %s24, 0
    %p129 = por %p127, %p128
    %p130 = scmp.ne.s32.totalorder %s118, %s119
    %p131 = scmp.eq.s32.totalorder %s25, 1
    %p132 = por %p130, %p131
    %p134 = scmp.ne.s32.totalorder %s119, %s133
    %p135 = scmp.eq.s32.totalorder %s25, 0
    %p136 = por %p134, %p135
    %s138 = sadd.s32 %s137, 1
    %p141 = scmp.eq.s32.totalorder %s19, 1
    %p142 = scmp.ne.s32.totalorder %s137, %s139
    %p143 = scmp.eq.s32.totalorder %s19, 0
    %p144 = por %p142, %p143
    %p145 = scmp.ne.s32.totalorder %s137, %s139
    %p146 = scmp.eq.s32.totalorder %s24, 1
    %p147 = por %p145, %p146
    %p148 = scmp.ne.s32.totalorder %s139, %s140
    %p149 = scmp.eq.s32.totalorder %s24, 0
    %p150 = por %p148, %p149
    %p151 = scmp.ne.s32.totalorder %s139, %s140
    %p152 = scmp.eq.s32.totalorder %s25, 1
    %p153 = por %p151, %p152
    %p155 = scmp.ne.s32.totalorder %s140, %s154
    %p156 = scmp.eq.s32.totalorder %s25, 0
    %p157 = por %p155, %p156
    %s159 = sadd.s32 %s158, 1
    %p162 = scmp.eq.s32.totalorder %s19, 1
    %p163 = scmp.ne.s32.totalorder %s158, %s160
    %p164 = scmp.eq.s32.totalorder %s19, 0
    %p165 = por %p163, %p164
    %p166 = scmp.ne.s32.totalorder %s158, %s160
    %p167 = scmp.eq.s32.totalorder %s24, 1
    %p168 = por %p166, %p167
    %p169 = scmp.ne.s32.totalorder %s160, %s161
    %p170 = scmp.eq.s32.totalorder %s24, 0
    %p171 = por %p169, %p170
    %p172 = scmp.ne.s32.totalorder %s160, %s161
    %p173 = scmp.eq.s32.totalorder %s25, 1
    %p174 = por %p172, %p173
    %p176 = scmp.ne.s32.totalorder %s161, %s175
    %p177 = scmp.eq.s32.totalorder %s25, 0
    %p178 = por %p176, %p177
    %s180 = sadd.s32 %s179, 1
    %p183 = scmp.eq.s32.totalorder %s19, 1
    %p184 = scmp.ne.s32.totalorder %s179, %s181
    %p185 = scmp.eq.s32.totalorder %s19, 0
    %p186 = por %p184, %p185
    %p187 = scmp.ne.s32.totalorder %s179, %s181
    %p188 = scmp.eq.s32.totalorder %s24, 1
    %p189 = por %p187, %p188
    %p190 = scmp.ne.s32.totalorder %s181, %s182
    %p191 = scmp.eq.s32.totalorder %s24, 0
    %p192 = por %p190, %p191
    %p193 = scmp.ne.s32.totalorder %s181, %s182
    %p194 = scmp.eq.s32.totalorder %s25, 1
    %p195 = por %p193, %p194
    %p197 = scmp.ne.s32.totalorder %s182, %s196
    %p198 = scmp.eq.s32.totalorder %s25, 0
    %p199 = por %p197, %p198
    %s201 = sadd.s32 %s200, 1
    %p204 = scmp.eq.s32.totalorder %s19, 1
    %p205 = scmp.ne.s32.totalorder %s200, %s202
    %p206 = scmp.eq.s32.totalorder %s19, 0
    %p207 = por %p205, %p206
    %p208 = scmp.ne.s32.totalorder %s200, %s202
    %p209 = scmp.eq.s32.totalorder %s24, 1
    %p210 = por %p208, %p209
    %p211 = scmp.ne.s32.totalorder %s202, %s203
    %p212 = scmp.eq.s32.totalorder %s24, 0
    %p213 = por %p211, %p212
    %p214 = scmp.ne.s32.totalorder %s202, %s203
    %p215 = scmp.eq.s32.totalorder %s25, 1
    %p216 = por %p214, %p215
    %p218 = scmp.ne.s32.totalorder %s203, %s217
    %p219 = scmp.eq.s32.totalorder %s25, 0
    %p220 = por %p218, %p219
    %s222 = sadd.s32 %s221, 1
    %p225 = scmp.eq.s32.totalorder %s19, 1
    %p226 = scmp.ne.s32.totalorder %s221, %s223
    %p227 = scmp.eq.s32.totalorder %s19, 0
    %p228 = por %p226, %p227
    %p229 = scmp.ne.s32.totalorder %s221, %s223
    %p230 = scmp.eq.s32.totalorder %s24, 1
    %p231 = por %p229, %p230
    %p232 = scmp.ne.s32.totalorder %s223, %s224
    %p233 = scmp.eq.s32.totalorder %s24, 0
    %p234 = por %p232, %p233
    %p235 = scmp.ne.s32.totalorder %s223, %s224
    %p236 = scmp.eq.s32.totalorder %s25, 1
    %p237 = por %p235, %p236
    %p239 = scmp.ne.s32.totalorder %s224, %s238
    %p240 = scmp.eq.s32.totalorder %s25, 0
    %p241 = por %p239, %p240
    %s243 = sadd.s32 %s242, 1
    %p246 = scmp.eq.s32.totalorder %s19, 1
    %p247 = scmp.ne.s32.totalorder %s242, %s244
    %p248 = scmp.eq.s32.totalorder %s19, 0
    %p249 = por %p247, %p248
    %p250 = scmp.ne.s32.totalorder %s242, %s244
    %p251 = scmp.eq.s32.totalorder %s24, 1
    %p252 = por %p250, %p251
    %p253 = scmp.ne.s32.totalorder %s244, %s245
    %p254 = scmp.eq.s32.totalorder %s24, 0
    %p255 = por %p253, %p254
    %p256 = scmp.ne.s32.totalorder %s244, %s245
    %p257 = scmp.eq.s32.totalorder %s25, 1
    %p258 = por %p256, %p257
    %p260 = scmp.ne.s32.totalorder %s245, %s259
    %p261 = scmp.eq.s32.totalorder %s25, 0
    %p262 = por %p260, %p261
    %s264 = sadd.s32 %s263, 1
    %p267 = scmp.eq.s32.totalorder %s19, 1
    %p268 = scmp.ne.s32.totalorder %s263, %s265
    %p269 = scmp.eq.s32.totalorder %s19, 0
    %p270 = por %p268, %p269
    %p271 = scmp.ne.s32.totalorder %s263, %s265
    %p272 = scmp.eq.s32.totalorder %s24, 1
    %p273 = por %p271, %p272
    %p274 = scmp.ne.s32.totalorder %s265, %s266
    %p275 = scmp.eq.s32.totalorder %s24, 0
    %p276 = por %p274, %p275
    %p277 = scmp.ne.s32.totalorder %s265, %s266
    %p278 = scmp.eq.s32.totalorder %s25, 1
    %p279 = por %p277, %p278
    %p281 = scmp.ne.s32.totalorder %s266, %s280
    %p282 = scmp.eq.s32.totalorder %s25, 0
    %p283 = por %p281, %p282
    %s285 = sadd.s32 %s284, 1
    %p288 = scmp.eq.s32.totalorder %s19, 1
    %p289 = scmp.ne.s32.totalorder %s284, %s286
    %p290 = scmp.eq.s32.totalorder %s19, 0
    %p291 = por %p289, %p290
    %p292 = scmp.ne.s32.totalorder %s284, %s286
    %p293 = scmp.eq.s32.totalorder %s24, 1
    %p294 = por %p292, %p293
    %p295 = scmp.ne.s32.totalorder %s286, %s287
    %p296 = scmp.eq.s32.totalorder %s24, 0
    %p297 = por %p295, %p296
    %p298 = scmp.ne.s32.totalorder %s286, %s287
    %p299 = scmp.eq.s32.totalorder %s25, 1
    %p300 = por %p298, %p299
    %p302 = scmp.ne.s32.totalorder %s287, %s301
    %p303 = scmp.eq.s32.totalorder %s25, 0
    %p304 = por %p302, %p303
    %s305 = ssub.s32 %s19, %s26
    %p306 = scmp.eq.s32.totalorder %s305, 0
    %s308 = sadd.s32 %s307, 1
    %s309 = scalar_select %p306, %s307, %s308
    %p312 = pneg %p306
    %p313 = scmp.eq.s32.totalorder %s19, 1
    %p314 = por %p312, %p313
    %p315 = scmp.ne.s32.totalorder %s307, %s310
    %p316 = scmp.eq.s32.totalorder %s19, 0
    %p317 = por %p315, %p316
    %p318 = scmp.ne.s32.totalorder %s307, %s310
    %p319 = scmp.eq.s32.totalorder %s24, 1
    %p320 = por %p318, %p319
    %p321 = scmp.ne.s32.totalorder %s310, %s311
    %p322 = scmp.eq.s32.totalorder %s24, 0
    %p323 = por %p321, %p322
    %p324 = scmp.ne.s32.totalorder %s310, %s311
    %p325 = scmp.eq.s32.totalorder %s25, 1
    %p326 = por %p324, %p325
    %p328 = scmp.ne.s32.totalorder %s311, %s327
    %p329 = scmp.eq.s32.totalorder %s25, 0
    %p330 = por %p328, %p329
    %p331 = scmp.le.s32.totalorder 1, %s19
    %p332 = scmp.lt.s32.totalorder %s19, 3
    %p333 = pnand %p331, %p332
    %p334 = pneg %p333
    // Predicated region
    $region9: #{_vae_forward_impl.1} parent=5 // pred_check
      _
    $region10: #{_vae_forward_impl.1} parent=5 // pred_check_branch
      %336 = sbr.rel (%p333) target = $region12
    $region11: #{_vae_forward_impl.1} parent=5 // pred_region
      %s337 = ssub.s32 %s19, 1
      // Predicated region
      $region13: #{_vae_forward_impl.1} parent=11 // pred_check
        %p338 = pneg %p66
      $region14: #{_vae_forward_impl.1} parent=11 // pred_check_branch
        %340 = sbr.rel (%p338) target = $region16
      $region15: #{_vae_forward_impl.1} parent=11 // pred_region
        _
      $region16: #{_vae_forward_impl.1} parent=11 // pred_fallthru
        _
      // Predicated region
      $region17: #{_vae_forward_impl.1} parent=11 // pred_check
        %p341 = pneg %p87
      $region18: #{_vae_forward_impl.1} parent=11 // pred_check_branch
        %343 = sbr.rel (%p341) target = $region20
      $region19: #{_vae_forward_impl.1} parent=11 // pred_region
        _
      $region20: #{_vae_forward_impl.1} parent=11 // pred_fallthru
        _
      // Predicated region
      $region21: #{_vae_forward_impl.1} parent=11 // pred_check
        %p344 = pneg %p108
      $region22: #{_vae_forward_impl.1} parent=11 // pred_check_branch
        %346 = sbr.rel (%p344) target = $region24
      $region23: #{_vae_forward_impl.1} parent=11 // pred_region
        _
      $region24: #{_vae_forward_impl.1} parent=11 // pred_fallthru
        _
      // Predicated region
      $region25: #{_vae_forward_impl.1} parent=11 // pred_check
        %p347 = pneg %p129
      $region26: #{_vae_forward_impl.1} parent=11 // pred_check_branch
        %349 = sbr.rel (%p347) target = $region28
      $region27: #{_vae_forward_impl.1} parent=11 // pred_region
        _
      $region28: #{_vae_forward_impl.1} parent=11 // pred_fallthru
        _
      // Predicated region
      $region29: #{_vae_forward_impl.1} parent=11 // pred_check
        %p350 = pneg %p150
      $region30: #{_vae_forward_impl.1} parent=11 // pred_check_branch
        %352 = sbr.rel (%p350) target = $region32
      $region31: #{_vae_forward_impl.1} parent=11 // pred_region
        _
      $region32: #{_vae_forward_impl.1} parent=11 // pred_fallthru
        _
      // Predicated region
      $region33: #{_vae_forward_impl.1} parent=11 // pred_check
        %p353 = pneg %p171
      $region34: #{_vae_forward_impl.1} parent=11 // pred_check_branch
        %355 = sbr.rel (%p353) target = $region36
      $region35: #{_vae_forward_impl.1} parent=11 // pred_region
        _
      $region36: #{_vae_forward_impl.1} parent=11 // pred_fallthru
        _
      // Predicated region
      $region37: #{_vae_forward_impl.1} parent=11 // pred_check
        %p356 = pneg %p192
      $region38: #{_vae_forward_impl.1} parent=11 // pred_check_branch
        %358 = sbr.rel (%p356) target = $region40
      $region39: #{_vae_forward_impl.1} parent=11 // pred_region
        _
      $region40: #{_vae_forward_impl.1} parent=11 // pred_fallthru
        _
      // Predicated region
      $region41: #{_vae_forward_impl.1} parent=11 // pred_check
        %p359 = pneg %p213
      $region42: #{_vae_forward_impl.1} parent=11 // pred_check_branch
        %361 = sbr.rel (%p359) target = $region44
      $region43: #{_vae_forward_impl.1} parent=11 // pred_region
        _
      $region44: #{_vae_forward_impl.1} parent=11 // pred_fallthru
        _
      // Predicated region
      $region45: #{_vae_forward_impl.1} parent=11 // pred_check
        %p362 = pneg %p234
      $region46: #{_vae_forward_impl.1} parent=11 // pred_check_branch
        %364 = sbr.rel (%p362) target = $region48
      $region47: #{_vae_forward_impl.1} parent=11 // pred_region
        _
      $region48: #{_vae_forward_impl.1} parent=11 // pred_fallthru
        _
      // Predicated region
      $region49: #{_vae_forward_impl.1} parent=11 // pred_check
        %p365 = pneg %p255
      $region50: #{_vae_forward_impl.1} parent=11 // pred_check_branch
        %367 = sbr.rel (%p365) target = $region52
      $region51: #{_vae_forward_impl.1} parent=11 // pred_region
        _
      $region52: #{_vae_forward_impl.1} parent=11 // pred_fallthru
        _
      // Predicated region
      $region53: #{_vae_forward_impl.1} parent=11 // pred_check
        %p368 = pneg %p276
      $region54: #{_vae_forward_impl.1} parent=11 // pred_check_branch
        %370 = sbr.rel (%p368) target = $region56
      $region55: #{_vae_forward_impl.1} parent=11 // pred_region
        _
      $region56: #{_vae_forward_impl.1} parent=11 // pred_fallthru
        _
      // Predicated region
      $region57: #{_vae_forward_impl.1} parent=11 // pred_check
        %p371 = pneg %p297
      $region58: #{_vae_forward_impl.1} parent=11 // pred_check_branch
        %373 = sbr.rel (%p371) target = $region60
      $region59: #{_vae_forward_impl.1} parent=11 // pred_region
        _
      $region60: #{_vae_forward_impl.1} parent=11 // pred_fallthru
        _
    $region12: #{_vae_forward_impl.1} parent=5 // pred_fallthru
      _
    %p374 = scmp.lt.s32.totalorder %s19, 2
    // Predicated region
    $region61: #{_vae_forward_impl.1} parent=5 // pred_check
      %p375 = pneg %p374
    $region62: #{_vae_forward_impl.1} parent=5 // pred_check_branch
      %377 = sbr.rel (%p375) target = $region64
    $region63: #{_vae_forward_impl.1} parent=5 // pred_region
      // Predicated region
      $region65: #{_vae_forward_impl.1} parent=63 // pred_check
        %p378 = pneg %p39
      $region66: #{_vae_forward_impl.1} parent=63 // pred_check_branch
        %380 = sbr.rel (%p378) target = $region68
      $region67: #{_vae_forward_impl.1} parent=63 // pred_region
        %s381 = smul.u32 16, %s19
        %p382 = scmp.lt.s32.totalorder %s381, 31
        %s383 = scalar_select %p382, %s381, 31
        %s384 = smul.addr %s383, 8
        %s385 = scalar_lea.vmem %s0, %s384
        %s386 = smul.u32 16, %s19
      $region68: #{_vae_forward_impl.1} parent=63 // pred_fallthru
        _
    $region64: #{_vae_forward_impl.1} parent=5 // pred_fallthru
      _
    %p387 = scmp.le.s32.totalorder 1, %s19
    %p388 = scmp.lt.s32.totalorder %s19, 3
    %p389 = pnand %p387, %p388
    %p390 = pneg %p389
    // Predicated region
    $region69: #{_vae_forward_impl.1} parent=5 // pred_check
      _
    $region70: #{_vae_forward_impl.1} parent=5 // pred_check_branch
      %392 = sbr.rel (%p389) target = $region72
    $region71: #{_vae_forward_impl.1} parent=5 // pred_region
      %s393 = ssub.s32 %s19, 1
      %s394 = smul.u32 16, %s24
      %p395 = scmp.lt.s32.totalorder %s394, 31
      %s396 = scalar_select %p395, %s394, 31
      %s397 = smul.addr %s396, 8
      %s398 = scalar_lea.vmem %s0, %s397
      %p399 = pneg %p45
      %p400 = pneg %p42
      %p401 = pneg %p66
      %p402 = pneg %p63
      %p403 = pneg %p87
      %p404 = pneg %p84
      %p405 = pneg %p108
      %p406 = pneg %p105
      %p407 = pneg %p129
      %p408 = pneg %p126
      %p409 = pneg %p150
      %p410 = pneg %p147
      %p411 = pneg %p171
      %p412 = pneg %p168
      %p413 = pneg %p192
      %p414 = pneg %p189
      %p415 = pneg %p213
      %p416 = pneg %p210
      %p417 = pneg %p234
      %p418 = pneg %p231
      %p419 = pneg %p255
      %p420 = pneg %p252
      %p421 = pneg %p276
      %p422 = pneg %p273
      %p423 = pneg %p297
      %p424 = pneg %p294
      %p425 = pneg %p323
      %p426 = pneg %p320
      %s427 = smul.u32 16, %s24
      %p428 = scmp.lt.s32.totalorder %s427, 31
      %s429 = scalar_select %p428, %s427, 31
      %s430 = smul.addr %s429, 8
      %s431 = scalar_lea.vmem %s13, %s430
      %s432 = smul.u32 16, %s24
      %p433 = scmp.lt.s32.totalorder %s432, 31
      %s434 = scalar_select %p433, %s432, 31
      %s435 = smul.addr %s434, 8
      %s436 = scalar_lea.vmem %s0, %s435
      %s437 = smul.u32 16, %s24
      %s438 = smul.u32 16, %s24
      %p439 = scmp.lt.s32.totalorder %s438, 31
      %s440 = scalar_select %p439, %s438, 31
      %s441 = smul.addr %s440, 8
      %s442 = scalar_lea.vmem %s13, %s441
      %s443 = smul.u32 16, %s24
      %v445 = vld [vmem:[%s436] sm:$0xff]
      %v446 = vld [vmem:[%s436 + $0x8] sm:$0xff]
      %v447 = vld [vmem:[%s436 + $0x10] sm:$0xff]
      %v448 = vld [vmem:[%s436 + $0x18] sm:$0xff]
      %v449 = vld [vmem:[%s436 + $0x20] sm:$0xff]
      %v450 = vld [vmem:[%s436 + $0x28] sm:$0xff]
      %v451 = vld [vmem:[%s436 + $0x30] sm:$0xff]
      %v452 = vld [vmem:[%s436 + $0x38] sm:$0xff]
      %v453 = vld [vmem:[%s436 + $0x40] sm:$0xff]
      %v454 = vld [vmem:[%s436 + $0x48] sm:$0xff]
      %v455 = vld [vmem:[%s436 + $0x50] sm:$0xff]
      %v456 = vld [vmem:[%s436 + $0x58] sm:$0xff]
      %v457 = vld [vmem:[%s436 + $0x60] sm:$0xff]
      %v458 = vld [vmem:[%s436 + $0x68] sm:$0xff]
      %v459 = vld [vmem:[%s436 + $0x70] sm:$0xff]
      %v460 = vld [vmem:[%s436 + $0x78] sm:$0xff]
      %v461 = vpack.c.bf16 %v446, %v445
      %v462 = vpack.c.bf16 %v448, %v447
      %v463 = vpack.c.bf16 %v450, %v449
      %v464 = vpack.c.bf16 %v452, %v451
      %v465 = vpack.c.bf16 %v454, %v453
      %v466 = vpack.c.bf16 %v456, %v455
      %v467 = vpack.c.bf16 %v458, %v457
      %v468 = vpack.c.bf16 %v460, %v459
      %v469 = vld [vmem:[%s1] sm:$0xf]
      %v470 = vld [vmem:[%s1 + $0x4] sm:$0xf]
      %v471 = vld [vmem:[%s1 + $0x8] sm:$0xf]
      %v472 = vld [vmem:[%s1 + $0xc] sm:$0xf]
      %v473 = vld [vmem:[%s2] sm:$0x1]
      %v475 = vlaneseq
      %v476 = vshrl.u32 %v475, 7
      %v477 = vsub.s32 0, %v476
      %v478 = vrot.slane %v473, %v477
      %v484 = vunpack.c.l.b16 %v469
      %v485 = vunpack.c.l.b16 %v470
      %v486 = vunpack.c.l.b16 %v471
      %v487 = vunpack.c.l.b16 %v472
      %v488 = vpack.c.b16 %v485, %v484
      %v489 = vpack.c.b16 %v487, %v486
      %vm492 = vcmask 261120
      %v494 = vsel %vm492, %v461, 0
      %v497 = vsel %vm492, %v462, 0
      %v500 = vsel %vm492, %v463, 0
      %v503 = vsel %vm492, %v464, 0
      %v506 = vsel %vm492, %v465, 0
      %v509 = vsel %vm492, %v466, 0
      %v512 = vsel %vm492, %v467, 0
      %v515 = vsel %vm492, %v468, 0
      %517 = vmatprep.subr.bf16.mxu0 0
      %518 = vmatpush1.bf16.msra.mxu0 %v488
      %519 = vmatprep.subr.bf16.mxu0 0
      %520 = vmatpush1.bf16.msra.mxu0 %v489
      %521 = vmatprep.subr.bf16.mxu0 0
      %522 = vmatpush1.bf16.msra.mxu0 0
      %523 = vmatprep.subr.bf16.mxu0 0
      %524 = vmatpush1.bf16.msra.mxu0 0
      %525 = vmatprep.subr.bf16.mxu0 0
      %526 = vmatpush1.bf16.msra.mxu0 0
      %527 = vmatprep.subr.bf16.mxu0 0
      %528 = vmatpush1.bf16.msra.mxu0 0
      %529 = vmatprep.subr.bf16.mxu0 0
      %530 = vmatpush1.bf16.msra.mxu0 0
      %531 = vmatprep.subr.bf16.mxu0 0
      %532 = vmatpush1.bf16.msra.mxu0 0
      %533 = vmatprep.subr.bf16.mxu0 0
      %534 = vmatpush1.bf16.msra.mxu0 0
      %535 = vmatprep.subr.bf16.mxu0 0
      %536 = vmatpush1.bf16.msra.mxu0 0
      %537 = vmatprep.subr.bf16.mxu0 0
      %538 = vmatpush1.bf16.msra.mxu0 0
      %539 = vmatprep.subr.bf16.mxu0 0
      %540 = vmatpush1.bf16.msra.mxu0 0
      %541 = vmatprep.subr.bf16.mxu0 0
      %542 = vmatpush1.bf16.msra.mxu0 0
      %543 = vmatprep.subr.bf16.mxu0 0
      %544 = vmatpush1.bf16.msra.mxu0 0
      %545 = vmatprep.subr.bf16.mxu0 0
      %546 = vmatpush1.bf16.msra.mxu0 0
      %547 = vmatprep.subr.bf16.mxu0 0
      %548 = vmatpush1.bf16.msra.mxu0 0
      %549 = vmatprep.mubr.bf16.mxu0 0
      %550 = vmatmul.mubr.bf16.gmra.mrb[0].mxu0 %v494
      %v551 = vpop.f32.mrb[0].mxu0
      %v552 = vadd.f32 %v478, %v551
      %v553 = vpop.f32.mrb[0].mxu0
      %v554 = vpop.f32.mrb[0].mxu0
      %v555 = vadd.f32 %v478, %v554
      %v556 = vpop.f32.mrb[0].mxu0
      %557 = vmatprep.mubr.bf16.mxu0 0
      %558 = vmatmul.mubr.bf16.gmra.mrb[0].mxu0 %v497
      %v559 = vpop.f32.mrb[0].mxu0
      %v560 = vadd.f32 %v478, %v559
      %v561 = vpop.f32.mrb[0].mxu0
      %v562 = vpop.f32.mrb[0].mxu0
      %v563 = vadd.f32 %v478, %v562
      %v564 = vpop.f32.mrb[0].mxu0
      %565 = vmatprep.mubr.bf16.mxu0 0
      %566 = vmatmul.mubr.bf16.gmra.mrb[0].mxu0 %v500
      %v567 = vpop.f32.mrb[0].mxu0
      %v568 = vadd.f32 %v478, %v567
      %v569 = vpop.f32.mrb[0].mxu0
      %v570 = vpop.f32.mrb[0].mxu0
      %v571 = vadd.f32 %v478, %v570
      %v572 = vpop.f32.mrb[0].mxu0
      %573 = vmatprep.mubr.bf16.mxu0 0
      %574 = vmatmul.mubr.bf16.gmra.mrb[0].mxu0 %v503
      %v575 = vpop.f32.mrb[0].mxu0
      %v576 = vadd.f32 %v478, %v575
      %v577 = vpop.f32.mrb[0].mxu0
      %v578 = vpop.f32.mrb[0].mxu0
      %v579 = vadd.f32 %v478, %v578
      %v580 = vpop.f32.mrb[0].mxu0
      %581 = vmatprep.mubr.bf16.mxu0 0
      %582 = vmatmul.mubr.bf16.gmra.mrb[0].mxu0 %v506
      %v583 = vpop.f32.mrb[0].mxu0
      %v584 = vadd.f32 %v478, %v583
      %v585 = vpop.f32.mrb[0].mxu0
      %v586 = vpop.f32.mrb[0].mxu0
      %v587 = vadd.f32 %v478, %v586
      %v588 = vpop.f32.mrb[0].mxu0
      %589 = vmatprep.mubr.bf16.mxu0 0
      %590 = vmatmul.mubr.bf16.gmra.mrb[0].mxu0 %v509
      %v591 = vpop.f32.mrb[0].mxu0
      %v592 = vadd.f32 %v478, %v591
      %v593 = vpop.f32.mrb[0].mxu0
      %v594 = vpop.f32.mrb[0].mxu0
      %v595 = vadd.f32 %v478, %v594
      %v596 = vpop.f32.mrb[0].mxu0
      %597 = vmatprep.mubr.bf16.mxu0 0
      %598 = vmatmul.mubr.bf16.gmra.mrb[0].mxu0 %v512
      %v599 = vpop.f32.mrb[0].mxu0
      %v600 = vadd.f32 %v478, %v599
      %v601 = vpop.f32.mrb[0].mxu0
      %v602 = vpop.f32.mrb[0].mxu0
      %v603 = vadd.f32 %v478, %v602
      %v604 = vpop.f32.mrb[0].mxu0
      %605 = vmatprep.mubr.bf16.mxu0 0
      %606 = vmatmul.mubr.bf16.gmra.mrb[0].mxu0 %v515
      %v607 = vpop.f32.mrb[0].mxu0
      %v608 = vadd.f32 %v478, %v607
      %v609 = vpop.f32.mrb[0].mxu0
      %v610 = vpop.f32.mrb[0].mxu0
      %v611 = vadd.f32 %v478, %v610
      %v612 = vpop.f32.mrb[0].mxu0
      %613 = vdwg.mxu0
      %v614 = vmax.f32 %v552, 0.0
      %v615 = vmax.f32 %v555, 0.0
      %v616 = vmax.f32 %v560, 0.0
      %v617 = vmax.f32 %v563, 0.0
      %v618 = vmax.f32 %v568, 0.0
      %v619 = vmax.f32 %v571, 0.0
      %v620 = vmax.f32 %v576, 0.0
      %v621 = vmax.f32 %v579, 0.0
      %v622 = vmax.f32 %v584, 0.0
      %v623 = vmax.f32 %v587, 0.0
      %v624 = vmax.f32 %v592, 0.0
      %v625 = vmax.f32 %v595, 0.0
      %v626 = vmax.f32 %v600, 0.0
      %v627 = vmax.f32 %v603, 0.0
      %v628 = vmax.f32 %v608, 0.0
      %v629 = vmax.f32 %v611, 0.0
      %v630 = vpack.c.bf16 %v615, %v614
      %v631 = vpack.c.bf16 %v617, %v616
      %v632 = vpack.c.bf16 %v619, %v618
      %v633 = vpack.c.bf16 %v621, %v620
      %v634 = vpack.c.bf16 %v623, %v622
      %v635 = vpack.c.bf16 %v625, %v624
      %v636 = vpack.c.bf16 %v627, %v626
      %v637 = vpack.c.bf16 %v629, %v628
      %v638 = vld [vmem:[%s3] sm:$0xf]
      %v639 = vld [vmem:[%s3 + $0x4] sm:$0xf]
      %v640 = vld [vmem:[%s3 + $0x8] sm:$0xf]
      %v641 = vld [vmem:[%s3 + $0xc] sm:$0xf]
      %v642 = vld [vmem:[%s3 + $0x10] sm:$0xf]
      %v643 = vld [vmem:[%s3 + $0x14] sm:$0xf]
      %v644 = vld [vmem:[%s3 + $0x18] sm:$0xf]
      %v645 = vld [vmem:[%s3 + $0x1c] sm:$0xf]
      %v646 = vld [vmem:[%s4] sm:$0x1]
      %v648 = vlaneseq
      %v649 = vshrl.u32 %v648, 7
      %v650 = vsub.s32 0, %v649
      %v651 = vrot.slane %v646, %v650
      %v661 = vunpack.c.l.b16 %v638
      %v662 = vunpack.c.l.b16 %v639
      %v663 = vunpack.c.l.b16 %v640
      %v664 = vunpack.c.l.b16 %v641
      %v665 = vunpack.c.l.b16 %v642
      %v666 = vunpack.c.l.b16 %v643
      %v667 = vunpack.c.l.b16 %v644
      %v668 = vunpack.c.l.b16 %v645
      %v669 = vpack.c.b16 %v662, %v661
      %v670 = vpack.c.b16 %v664, %v663
      %v671 = vpack.c.b16 %v666, %v665
      %v672 = vpack.c.b16 %v668, %v667
      %vm677 = vcmask 523264
      %v679 = vsel %vm677, %v630, 0
      %v682 = vsel %vm677, %v631, 0
      %v685 = vsel %vm677, %v632, 0
      %v688 = vsel %vm677, %v633, 0
      %v691 = vsel %vm677, %v634, 0
      %v694 = vsel %vm677, %v635, 0
      %v697 = vsel %vm677, %v636, 0
      %v700 = vsel %vm677, %v637, 0
      %702 = vmatprep.subr.bf16.mxu0 0
      %703 = vmatpush1.bf16.msra.mxu0 %v669
      %704 = vmatprep.subr.bf16.mxu0 0
      %705 = vmatpush1.bf16.msra.mxu0 %v670
      %706 = vmatprep.subr.bf16.mxu0 0
      %707 = vmatpush1.bf16.msra.mxu0 %v671
      %708 = vmatprep.subr.bf16.mxu0 0
      %709 = vmatpush1.bf16.msra.mxu0 %v672
      %710 = vmatprep.subr.bf16.mxu0 0
      %711 = vmatpush1.bf16.msra.mxu0 0
      %712 = vmatprep.subr.bf16.mxu0 0
      %713 = vmatpush1.bf16.msra.mxu0 0
      %714 = vmatprep.subr.bf16.mxu0 0
      %715 = vmatpush1.bf16.msra.mxu0 0
      %716 = vmatprep.subr.bf16.mxu0 0
      %717 = vmatpush1.bf16.msra.mxu0 0
      %718 = vmatprep.subr.bf16.mxu0 0
      %719 = vmatpush1.bf16.msra.mxu0 0
      %720 = vmatprep.subr.bf16.mxu0 0
      %721 = vmatpush1.bf16.msra.mxu0 0
      %722 = vmatprep.subr.bf16.mxu0 0
      %723 = vmatpush1.bf16.msra.mxu0 0
      %724 = vmatprep.subr.bf16.mxu0 0
      %725 = vmatpush1.bf16.msra.mxu0 0
      %726 = vmatprep.subr.bf16.mxu0 0
      %727 = vmatpush1.bf16.msra.mxu0 0
      %728 = vmatprep.subr.bf16.mxu0 0
      %729 = vmatpush1.bf16.msra.mxu0 0
      %730 = vmatprep.subr.bf16.mxu0 0
      %731 = vmatpush1.bf16.msra.mxu0 0
      %732 = vmatprep.subr.bf16.mxu0 0
      %733 = vmatpush1.bf16.msra.mxu0 0
      %734 = vmatprep.mubr.bf16.mxu0 0
      %735 = vmatmul.mubr.bf16.gmra.mrb[0].mxu0 %v679
      %v736 = vpop.f32.mrb[0].mxu0
      %v737 = vadd.f32 %v651, %v736
      %v738 = vpop.f32.mrb[0].mxu0
      %v739 = vpop.f32.mrb[0].mxu0
      %v740 = vadd.f32 %v651, %v739
      %v741 = vpop.f32.mrb[0].mxu0
      %742 = vmatprep.mubr.bf16.mxu0 0
      %743 = vmatmul.mubr.bf16.gmra.mrb[0].mxu0 %v682
      %v744 = vpop.f32.mrb[0].mxu0
      %v745 = vadd.f32 %v651, %v744
      %v746 = vpop.f32.mrb[0].mxu0
      %v747 = vpop.f32.mrb[0].mxu0
      %v748 = vadd.f32 %v651, %v747
      %v749 = vpop.f32.mrb[0].mxu0
      %750 = vmatprep.mubr.bf16.mxu0 0
      %751 = vmatmul.mubr.bf16.gmra.mrb[0].mxu0 %v685
      %v752 = vpop.f32.mrb[0].mxu0
      %v753 = vadd.f32 %v651, %v752
      %v754 = vpop.f32.mrb[0].mxu0
      %v755 = vpop.f32.mrb[0].mxu0
      %v756 = vadd.f32 %v651, %v755
      %v757 = vpop.f32.mrb[0].mxu0
      %758 = vmatprep.mubr.bf16.mxu0 0
      %759 = vmatmul.mubr.bf16.gmra.mrb[0].mxu0 %v688
      %v760 = vpop.f32.mrb[0].mxu0
      %v761 = vadd.f32 %v651, %v760
      %v762 = vpop.f32.mrb[0].mxu0
      %v763 = vpop.f32.mrb[0].mxu0
      %v764 = vadd.f32 %v651, %v763
      %v765 = vpop.f32.mrb[0].mxu0
      %766 = vmatprep.mubr.bf16.mxu0 0
      %767 = vmatmul.mubr.bf16.gmra.mrb[0].mxu0 %v691
      %v768 = vpop.f32.mrb[0].mxu0
      %v769 = vadd.f32 %v651, %v768
      %v770 = vpop.f32.mrb[0].mxu0
      %v771 = vpop.f32.mrb[0].mxu0
      %v772 = vadd.f32 %v651, %v771
      %v773 = vpop.f32.mrb[0].mxu0
      %774 = vmatprep.mubr.bf16.mxu0 0
      %775 = vmatmul.mubr.bf16.gmra.mrb[0].mxu0 %v694
      %v776 = vpop.f32.mrb[0].mxu0
      %v777 = vadd.f32 %v651, %v776
      %v778 = vpop.f32.mrb[0].mxu0
      %v779 = vpop.f32.mrb[0].mxu0
      %v780 = vadd.f32 %v651, %v779
      %v781 = vpop.f32.mrb[0].mxu0
      %782 = vmatprep.mubr.bf16.mxu0 0
      %783 = vmatmul.mubr.bf16.gmra.mrb[0].mxu0 %v697
      %v784 = vpop.f32.mrb[0].mxu0
      %v785 = vadd.f32 %v651, %v784
      %v786 = vpop.f32.mrb[0].mxu0
      %v787 = vpop.f32.mrb[0].mxu0
      %v788 = vadd.f32 %v651, %v787
      %v789 = vpop.f32.mrb[0].mxu0
      %790 = vmatprep.mubr.bf16.mxu0 0
      %791 = vmatmul.mubr.bf16.gmra.mrb[0].mxu0 %v700
      %v792 = vpop.f32.mrb[0].mxu0
      %v793 = vadd.f32 %v651, %v792
      %v794 = vpop.f32.mrb[0].mxu0
      %v795 = vpop.f32.mrb[0].mxu0
      %v796 = vadd.f32 %v651, %v795
      %v797 = vpop.f32.mrb[0].mxu0
      %798 = vdwg.mxu0
      %v799 = vmax.f32 %v737, 0.0
      %v800 = vmax.f32 %v740, 0.0
      %v801 = vmax.f32 %v745, 0.0
      %v802 = vmax.f32 %v748, 0.0
      %v803 = vmax.f32 %v753, 0.0
      %v804 = vmax.f32 %v756, 0.0
      %v805 = vmax.f32 %v761, 0.0
      %v806 = vmax.f32 %v764, 0.0
      %v807 = vmax.f32 %v769, 0.0
      %v808 = vmax.f32 %v772, 0.0
      %v809 = vmax.f32 %v777, 0.0
      %v810 = vmax.f32 %v780, 0.0
      %v811 = vmax.f32 %v785, 0.0
      %v812 = vmax.f32 %v788, 0.0
      %v813 = vmax.f32 %v793, 0.0
      %v814 = vmax.f32 %v796, 0.0
      %v815 = vpack.c.bf16 %v800, %v799
      %v816 = vpack.c.bf16 %v802, %v801
      %v817 = vpack.c.bf16 %v804, %v803
      %v818 = vpack.c.bf16 %v806, %v805
      %v819 = vpack.c.bf16 %v808, %v807
      %v820 = vpack.c.bf16 %v810, %v809
      %v821 = vpack.c.bf16 %v812, %v811
      %v822 = vpack.c.bf16 %v814, %v813
      %v823 = vld [vmem:[%s5] sm:$0xf]
      %v824 = vld [vmem:[%s5 + $0x4] sm:$0xf]
      %v825 = vld [vmem:[%s5 + $0x8] sm:$0xf]
      %v826 = vld [vmem:[%s5 + $0xc] sm:$0xf]
      %v827 = vld [vmem:[%s6] sm:$0x1]
      %v829 = vlaneseq
      %v830 = vshrl.u32 %v829, 7
      %v831 = vsub.s32 0, %v830
      %v832 = vrot.slane %v827, %v831
      %v838 = vunpack.c.l.b16 %v823
      %v839 = vunpack.c.l.b16 %v824
      %v840 = vunpack.c.l.b16 %v825
      %v841 = vunpack.c.l.b16 %v826
      %v842 = vpack.c.b16 %v839, %v838
      %v843 = vpack.c.b16 %v841, %v840
      %v847 = vsel %vm492, %v815, 0
      %v850 = vsel %vm492, %v816, 0
      %v853 = vsel %vm492, %v817, 0
      %v856 = vsel %vm492, %v818, 0
      %v859 = vsel %vm492, %v819, 0
      %v862 = vsel %vm492, %v820, 0
      %v865 = vsel %vm492, %v821, 0
      %v868 = vsel %vm492, %v822, 0
      %870 = vmatprep.subr.bf16.mxu0 0
      %871 = vmatpush1.bf16.msra.mxu0 %v842
      %872 = vmatprep.subr.bf16.mxu0 0
      %873 = vmatpush1.bf16.msra.mxu0 %v843
      %874 = vmatprep.subr.bf16.mxu0 0
      %875 = vmatpush1.bf16.msra.mxu0 0
      %876 = vmatprep.subr.bf16.mxu0 0
      %877 = vmatpush1.bf16.msra.mxu0 0
      %878 = vmatprep.subr.bf16.mxu0 0
      %879 = vmatpush1.bf16.msra.mxu0 0
      %880 = vmatprep.subr.bf16.mxu0 0
      %881 = vmatpush1.bf16.msra.mxu0 0
      %882 = vmatprep.subr.bf16.mxu0 0
      %883 = vmatpush1.bf16.msra.mxu0 0
      %884 = vmatprep.subr.bf16.mxu0 0
      %885 = vmatpush1.bf16.msra.mxu0 0
      %886 = vmatprep.subr.bf16.mxu0 0
      %887 = vmatpush1.bf16.msra.mxu0 0
      %888 = vmatprep.subr.bf16.mxu0 0
      %889 = vmatpush1.bf16.msra.mxu0 0
      %890 = vmatprep.subr.bf16.mxu0 0
      %891 = vmatpush1.bf16.msra.mxu0 0
      %892 = vmatprep.subr.bf16.mxu0 0
      %893 = vmatpush1.bf16.msra.mxu0 0
      %894 = vmatprep.subr.bf16.mxu0 0
      %895 = vmatpush1.bf16.msra.mxu0 0
      %896 = vmatprep.subr.bf16.mxu0 0
      %897 = vmatpush1.bf16.msra.mxu0 0
      %898 = vmatprep.subr.bf16.mxu0 0
      %899 = vmatpush1.bf16.msra.mxu0 0
      %900 = vmatprep.subr.bf16.mxu0 0
      %901 = vmatpush1.bf16.msra.mxu0 0
      %902 = vmatprep.mubr.bf16.mxu0 0
      %903 = vmatmul.mubr.bf16.gmra.mrb[0].mxu0 %v847
      %v904 = vpop.f32.mrb[0].mxu0
      %v905 = vadd.f32 %v832, %v904
      %v906 = vpop.f32.mrb[0].mxu0
      %v907 = vpop.f32.mrb[0].mxu0
      %v908 = vadd.f32 %v832, %v907
      %v909 = vpop.f32.mrb[0].mxu0
      %910 = vmatprep.mubr.bf16.mxu0 0
      %911 = vmatmul.mubr.bf16.gmra.mrb[0].mxu0 %v850
      %v912 = vpop.f32.mrb[0].mxu0
      %v913 = vadd.f32 %v832, %v912
      %v914 = vpop.f32.mrb[0].mxu0
      %v915 = vpop.f32.mrb[0].mxu0
      %v916 = vadd.f32 %v832, %v915
      %v917 = vpop.f32.mrb[0].mxu0
      %918 = vmatprep.mubr.bf16.mxu0 0
      %919 = vmatmul.mubr.bf16.gmra.mrb[0].mxu0 %v853
      %v920 = vpop.f32.mrb[0].mxu0
      %v921 = vadd.f32 %v832, %v920
      %v922 = vpop.f32.mrb[0].mxu0
      %v923 = vpop.f32.mrb[0].mxu0
      %v924 = vadd.f32 %v832, %v923
      %v925 = vpop.f32.mrb[0].mxu0
      %926 = vmatprep.mubr.bf16.mxu0 0
      %927 = vmatmul.mubr.bf16.gmra.mrb[0].mxu0 %v856
      %v928 = vpop.f32.mrb[0].mxu0
      %v929 = vadd.f32 %v832, %v928
      %v930 = vpop.f32.mrb[0].mxu0
      %v931 = vpop.f32.mrb[0].mxu0
      %v932 = vadd.f32 %v832, %v931
      %v933 = vpop.f32.mrb[0].mxu0
      %934 = vmatprep.mubr.bf16.mxu0 0
      %935 = vmatmul.mubr.bf16.gmra.mrb[0].mxu0 %v859
      %v936 = vpop.f32.mrb[0].mxu0
      %v937 = vadd.f32 %v832, %v936
      %v938 = vpop.f32.mrb[0].mxu0
      %v939 = vpop.f32.mrb[0].mxu0
      %v940 = vadd.f32 %v832, %v939
      %v941 = vpop.f32.mrb[0].mxu0
      %942 = vmatprep.mubr.bf16.mxu0 0
      %943 = vmatmul.mubr.bf16.gmra.mrb[0].mxu0 %v862
      %v944 = vpop.f32.mrb[0].mxu0
      %v945 = vadd.f32 %v832, %v944
      %v946 = vpop.f32.mrb[0].mxu0
      %v947 = vpop.f32.mrb[0].mxu0
      %v948 = vadd.f32 %v832, %v947
      %v949 = vpop.f32.mrb[0].mxu0
      %950 = vmatprep.mubr.bf16.mxu0 0
      %951 = vmatmul.mubr.bf16.gmra.mrb[0].mxu0 %v865
      %v952 = vpop.f32.mrb[0].mxu0
      %v953 = vadd.f32 %v832, %v952
      %v954 = vpop.f32.mrb[0].mxu0
      %v955 = vpop.f32.mrb[0].mxu0
      %v956 = vadd.f32 %v832, %v955
      %v957 = vpop.f32.mrb[0].mxu0
      %958 = vmatprep.mubr.bf16.mxu0 0
      %959 = vmatmul.mubr.bf16.gmra.mrb[0].mxu0 %v868
      %v960 = vpop.f32.mrb[0].mxu0
      %v961 = vadd.f32 %v832, %v960
      %v962 = vpop.f32.mrb[0].mxu0
      %v963 = vpop.f32.mrb[0].mxu0
      %v964 = vadd.f32 %v832, %v963
      %v965 = vpop.f32.mrb[0].mxu0
      %966 = vdwg.mxu0
      %v967 = vmul.f32 %v905, 0.5
      %v968 = vmul.f32 %v908, 0.5
      %v969 = vmul.f32 %v913, 0.5
      %v970 = vmul.f32 %v916, 0.5
      %v971 = vmul.f32 %v921, 0.5
      %v972 = vmul.f32 %v924, 0.5
      %v973 = vmul.f32 %v929, 0.5
      %v974 = vmul.f32 %v932, 0.5
      %v975 = vmul.f32 %v937, 0.5
      %v976 = vmul.f32 %v940, 0.5
      %v977 = vmul.f32 %v945, 0.5
      %v978 = vmul.f32 %v948, 0.5
      %v979 = vmul.f32 %v953, 0.5
      %v980 = vmul.f32 %v956, 0.5
      %v981 = vmul.f32 %v961, 0.5
      %v982 = vmul.f32 %v964, 0.5
      %v983 = vmul.f32 %v967, 1.442695
      %v984 = vpow.pop %v983
      %v985 = vmul.f32 %v968, 1.442695
      %v986 = vpow.pop %v985
      %v987 = vmul.f32 %v969, 1.442695
      %v988 = vpow.pop %v987
      %v989 = vmul.f32 %v970, 1.442695
      %v990 = vpow.pop %v989
      %v991 = vmul.f32 %v971, 1.442695
      %v992 = vpow.pop %v991
      %v993 = vmul.f32 %v972, 1.442695
      %v994 = vpow.pop %v993
      %v995 = vmul.f32 %v973, 1.442695
      %v996 = vpow.pop %v995
      %v997 = vmul.f32 %v974, 1.442695
      %v998 = vpow.pop %v997
      %v999 = vmul.f32 %v975, 1.442695
      %v1000 = vpow.pop %v999
      %v1001 = vmul.f32 %v976, 1.442695
      %v1002 = vpow.pop %v1001
      %v1003 = vmul.f32 %v977, 1.442695
      %v1004 = vpow.pop %v1003
      %v1005 = vmul.f32 %v978, 1.442695
      %v1006 = vpow.pop %v1005
      %v1007 = vmul.f32 %v979, 1.442695
      %v1008 = vpow.pop %v1007
      %v1009 = vmul.f32 %v980, 1.442695
      %v1010 = vpow.pop %v1009
      %v1011 = vmul.f32 %v981, 1.442695
      %v1012 = vpow.pop %v1011
      %v1013 = vmul.f32 %v982, 1.442695
      %v1014 = vpow.pop %v1013
      %1031 = vrot.lane.b32.xlu0 %v445, 112
      %v1032 = vpop.permute.xlu0 %1031
      %1033 = vrot.lane.b32.xlu0 %v446, 112
      %v1034 = vpop.permute.xlu0 %1033
      %1035 = vrot.lane.b32.xlu0 %v447, 112
      %v1036 = vpop.permute.xlu0 %1035
      %1037 = vrot.lane.b32.xlu0 %v448, 112
      %v1038 = vpop.permute.xlu0 %1037
      %1039 = vrot.lane.b32.xlu0 %v449, 112
      %v1040 = vpop.permute.xlu0 %1039
      %1041 = vrot.lane.b32.xlu0 %v450, 112
      %v1042 = vpop.permute.xlu0 %1041
      %1043 = vrot.lane.b32.xlu0 %v451, 112
      %v1044 = vpop.permute.xlu0 %1043
      %1045 = vrot.lane.b32.xlu0 %v452, 112
      %v1046 = vpop.permute.xlu0 %1045
      %1047 = vrot.lane.b32.xlu0 %v453, 112
      %v1048 = vpop.permute.xlu0 %1047
      %1049 = vrot.lane.b32.xlu0 %v454, 112
      %v1050 = vpop.permute.xlu0 %1049
      %1051 = vrot.lane.b32.xlu0 %v455, 112
      %v1052 = vpop.permute.xlu0 %1051
      %1053 = vrot.lane.b32.xlu0 %v456, 112
      %v1054 = vpop.permute.xlu0 %1053
      %1055 = vrot.lane.b32.xlu0 %v457, 112
      %v1056 = vpop.permute.xlu0 %1055
      %1057 = vrot.lane.b32.xlu0 %v458, 112
      %v1058 = vpop.permute.xlu0 %1057
      %1059 = vrot.lane.b32.xlu0 %v459, 112
      %v1060 = vpop.permute.xlu0 %1059
      %1061 = vrot.lane.b32.xlu0 %v460, 112
      %v1062 = vpop.permute.xlu0 %1061
      %v1079 = vmul.f32 %v984, %v1032
      %v1080 = vmul.f32 %v986, %v1034
      %v1081 = vmul.f32 %v988, %v1036
      %v1082 = vmul.f32 %v990, %v1038
      %v1083 = vmul.f32 %v992, %v1040
      %v1084 = vmul.f32 %v994, %v1042
      %v1085 = vmul.f32 %v996, %v1044
      %v1086 = vmul.f32 %v998, %v1046
      %v1087 = vmul.f32 %v1000, %v1048
      %v1088 = vmul.f32 %v1002, %v1050
      %v1089 = vmul.f32 %v1004, %v1052
      %v1090 = vmul.f32 %v1006, %v1054
      %v1091 = vmul.f32 %v1008, %v1056
      %v1092 = vmul.f32 %v1010, %v1058
      %v1093 = vmul.f32 %v1012, %v1060
      %v1094 = vmul.f32 %v1014, %v1062
      %1111 = vrot.lane.b32.xlu0 %v1079, 112
      %v1112 = vpop.permute.xlu0 %1111
      %1113 = vrot.lane.b32.xlu0 %v1080, 112
      %v1114 = vpop.permute.xlu0 %1113
      %1115 = vrot.lane.b32.xlu0 %v1081, 112
      %v1116 = vpop.permute.xlu0 %1115
      %1117 = vrot.lane.b32.xlu0 %v1082, 112
      %v1118 = vpop.permute.xlu0 %1117
      %1119 = vrot.lane.b32.xlu0 %v1083, 112
      %v1120 = vpop.permute.xlu0 %1119
      %1121 = vrot.lane.b32.xlu0 %v1084, 112
      %v1122 = vpop.permute.xlu0 %1121
      %1123 = vrot.lane.b32.xlu0 %v1085, 112
      %v1124 = vpop.permute.xlu0 %1123
      %1125 = vrot.lane.b32.xlu0 %v1086, 112
      %v1126 = vpop.permute.xlu0 %1125
      %1127 = vrot.lane.b32.xlu0 %v1087, 112
      %v1128 = vpop.permute.xlu0 %1127
      %1129 = vrot.lane.b32.xlu0 %v1088, 112
      %v1130 = vpop.permute.xlu0 %1129
      %1131 = vrot.lane.b32.xlu0 %v1089, 112
      %v1132 = vpop.permute.xlu0 %1131
      %1133 = vrot.lane.b32.xlu0 %v1090, 112
      %v1134 = vpop.permute.xlu0 %1133
      %1135 = vrot.lane.b32.xlu0 %v1091, 112
      %v1136 = vpop.permute.xlu0 %1135
      %1137 = vrot.lane.b32.xlu0 %v1092, 112
      %v1138 = vpop.permute.xlu0 %1137
      %1139 = vrot.lane.b32.xlu0 %v1093, 112
      %v1140 = vpop.permute.xlu0 %1139
      %1141 = vrot.lane.b32.xlu0 %v1094, 112
      %v1142 = vpop.permute.xlu0 %1141
      %v1159 = vadd.f32 %v905, %v1112
      %v1160 = vadd.f32 %v908, %v1114
      %v1161 = vadd.f32 %v913, %v1116
      %v1162 = vadd.f32 %v916, %v1118
      %v1163 = vadd.f32 %v921, %v1120
      %v1164 = vadd.f32 %v924, %v1122
      %v1165 = vadd.f32 %v929, %v1124
      %v1166 = vadd.f32 %v932, %v1126
      %v1167 = vadd.f32 %v937, %v1128
      %v1168 = vadd.f32 %v940, %v1130
      %v1169 = vadd.f32 %v945, %v1132
      %v1170 = vadd.f32 %v948, %v1134
      %v1171 = vadd.f32 %v953, %v1136
      %v1172 = vadd.f32 %v956, %v1138
      %v1173 = vadd.f32 %v961, %v1140
      %v1174 = vadd.f32 %v964, %v1142
      %v1175 = vmul.f32 %v1159, %v1159
      %v1176 = vmul.f32 %v1160, %v1160
      %v1177 = vmul.f32 %v1161, %v1161
      %v1178 = vmul.f32 %v1162, %v1162
      %v1179 = vmul.f32 %v1163, %v1163
      %v1180 = vmul.f32 %v1164, %v1164
      %v1181 = vmul.f32 %v1165, %v1165
      %v1182 = vmul.f32 %v1166, %v1166
      %v1183 = vmul.f32 %v1167, %v1167
      %v1184 = vmul.f32 %v1168, %v1168
      %v1185 = vmul.f32 %v1169, %v1169
      %v1186 = vmul.f32 %v1170, %v1170
      %v1187 = vmul.f32 %v1171, %v1171
      %v1188 = vmul.f32 %v1172, %v1172
      %v1189 = vmul.f32 %v1173, %v1173
      %v1190 = vmul.f32 %v1174, %v1174
      %1207 = vrot.lane.b32.xlu0 %v905, 112
      %v1208 = vpop.permute.xlu0 %1207
      %1209 = vrot.lane.b32.xlu0 %v908, 112
      %v1210 = vpop.permute.xlu0 %1209
      %1211 = vrot.lane.b32.xlu0 %v913, 112
      %v1212 = vpop.permute.xlu0 %1211
      %1213 = vrot.lane.b32.xlu0 %v916, 112
      %v1214 = vpop.permute.xlu0 %1213
      %1215 = vrot.lane.b32.xlu0 %v921, 112
      %v1216 = vpop.permute.xlu0 %1215
      %1217 = vrot.lane.b32.xlu0 %v924, 112
      %v1218 = vpop.permute.xlu0 %1217
      %1219 = vrot.lane.b32.xlu0 %v929, 112
      %v1220 = vpop.permute.xlu0 %1219
      %1221 = vrot.lane.b32.xlu0 %v932, 112
      %v1222 = vpop.permute.xlu0 %1221
      %1223 = vrot.lane.b32.xlu0 %v937, 112
      %v1224 = vpop.permute.xlu0 %1223
      %1225 = vrot.lane.b32.xlu0 %v940, 112
      %v1226 = vpop.permute.xlu0 %1225
      %1227 = vrot.lane.b32.xlu0 %v945, 112
      %v1228 = vpop.permute.xlu0 %1227
      %1229 = vrot.lane.b32.xlu0 %v948, 112
      %v1230 = vpop.permute.xlu0 %1229
      %1231 = vrot.lane.b32.xlu0 %v953, 112
      %v1232 = vpop.permute.xlu0 %1231
      %1233 = vrot.lane.b32.xlu0 %v956, 112
      %v1234 = vpop.permute.xlu0 %1233
      %1235 = vrot.lane.b32.xlu0 %v961, 112
      %v1236 = vpop.permute.xlu0 %1235
      %1237 = vrot.lane.b32.xlu0 %v964, 112
      %v1238 = vpop.permute.xlu0 %1237
      %v1255 = vsub.f32 %v1175, %v1208
      %v1256 = vsub.f32 %v1176, %v1210
      %v1257 = vsub.f32 %v1177, %v1212
      %v1258 = vsub.f32 %v1178, %v1214
      %v1259 = vsub.f32 %v1179, %v1216
      %v1260 = vsub.f32 %v1180, %v1218
      %v1261 = vsub.f32 %v1181, %v1220
      %v1262 = vsub.f32 %v1182, %v1222
      %v1263 = vsub.f32 %v1183, %v1224
      %v1264 = vsub.f32 %v1184, %v1226
      %v1265 = vsub.f32 %v1185, %v1228
      %v1266 = vsub.f32 %v1186, %v1230
      %v1267 = vsub.f32 %v1187, %v1232
      %v1268 = vsub.f32 %v1188, %v1234
      %v1269 = vsub.f32 %v1189, %v1236
      %v1270 = vsub.f32 %v1190, %v1238
      %v1271 = vmul.f32 %v445, %v445
      %v1272 = vmul.f32 %v446, %v446
      %v1273 = vmul.f32 %v447, %v447
      %v1274 = vmul.f32 %v448, %v448
      %v1275 = vmul.f32 %v449, %v449
      %v1276 = vmul.f32 %v450, %v450
      %v1277 = vmul.f32 %v451, %v451
      %v1278 = vmul.f32 %v452, %v452
      %v1279 = vmul.f32 %v453, %v453
      %v1280 = vmul.f32 %v454, %v454
      %v1281 = vmul.f32 %v455, %v455
      %v1282 = vmul.f32 %v456, %v456
      %v1283 = vmul.f32 %v457, %v457
      %v1284 = vmul.f32 %v458, %v458
      %v1285 = vmul.f32 %v459, %v459
      %v1286 = vmul.f32 %v460, %v460
      %1303 = vrot.lane.b32.xlu0 %v1271, 96
      %v1304 = vpop.permute.xlu0 %1303
      %1305 = vrot.lane.b32.xlu0 %v1272, 96
      %v1306 = vpop.permute.xlu0 %1305
      %1307 = vrot.lane.b32.xlu0 %v1273, 96
      %v1308 = vpop.permute.xlu0 %1307
      %1309 = vrot.lane.b32.xlu0 %v1274, 96
      %v1310 = vpop.permute.xlu0 %1309
      %1311 = vrot.lane.b32.xlu0 %v1275, 96
      %v1312 = vpop.permute.xlu0 %1311
      %1313 = vrot.lane.b32.xlu0 %v1276, 96
      %v1314 = vpop.permute.xlu0 %1313
      %1315 = vrot.lane.b32.xlu0 %v1277, 96
      %v1316 = vpop.permute.xlu0 %1315
      %1317 = vrot.lane.b32.xlu0 %v1278, 96
      %v1318 = vpop.permute.xlu0 %1317
      %1319 = vrot.lane.b32.xlu0 %v1279, 96
      %v1320 = vpop.permute.xlu0 %1319
      %1321 = vrot.lane.b32.xlu0 %v1280, 96
      %v1322 = vpop.permute.xlu0 %1321
      %1323 = vrot.lane.b32.xlu0 %v1281, 96
      %v1324 = vpop.permute.xlu0 %1323
      %1325 = vrot.lane.b32.xlu0 %v1282, 96
      %v1326 = vpop.permute.xlu0 %1325
      %1327 = vrot.lane.b32.xlu0 %v1283, 96
      %v1328 = vpop.permute.xlu0 %1327
      %1329 = vrot.lane.b32.xlu0 %v1284, 96
      %v1330 = vpop.permute.xlu0 %1329
      %1331 = vrot.lane.b32.xlu0 %v1285, 96
      %v1332 = vpop.permute.xlu0 %1331
      %1333 = vrot.lane.b32.xlu0 %v1286, 96
      %v1334 = vpop.permute.xlu0 %1333
      %v1351 = vsub.f32 %v1255, %v1304
      %v1352 = vsub.f32 %v1256, %v1306
      %v1353 = vsub.f32 %v1257, %v1308
      %v1354 = vsub.f32 %v1258, %v1310
      %v1355 = vsub.f32 %v1259, %v1312
      %v1356 = vsub.f32 %v1260, %v1314
      %v1357 = vsub.f32 %v1261, %v1316
      %v1358 = vsub.f32 %v1262, %v1318
      %v1359 = vsub.f32 %v1263, %v1320
      %v1360 = vsub.f32 %v1264, %v1322
      %v1361 = vsub.f32 %v1265, %v1324
      %v1362 = vsub.f32 %v1266, %v1326
      %v1363 = vsub.f32 %v1267, %v1328
      %v1364 = vsub.f32 %v1268, %v1330
      %v1365 = vsub.f32 %v1269, %v1332
      %v1366 = vsub.f32 %v1270, %v1334
      %v1367 = vmul.f32 %v1351, 0.5
      %v1368 = vmul.f32 %v1352, 0.5
      %v1369 = vmul.f32 %v1353, 0.5
      %v1370 = vmul.f32 %v1354, 0.5
      %v1371 = vmul.f32 %v1355, 0.5
      %v1372 = vmul.f32 %v1356, 0.5
      %v1373 = vmul.f32 %v1357, 0.5
      %v1374 = vmul.f32 %v1358, 0.5
      %v1375 = vmul.f32 %v1359, 0.5
      %v1376 = vmul.f32 %v1360, 0.5
      %v1377 = vmul.f32 %v1361, 0.5
      %v1378 = vmul.f32 %v1362, 0.5
      %v1379 = vmul.f32 %v1363, 0.5
      %v1380 = vmul.f32 %v1364, 0.5
      %v1381 = vmul.f32 %v1365, 0.5
      %v1382 = vmul.f32 %v1366, 0.5
      %vm1383 = vcmask 130048
      %v1384 = vsel %vm1383, %v1367, 0.0
      %1385 = vadd.xlane.f32.xlu0 %v1384
      %v1386 = vpop.xlane.xlu0 %1385
      %v1387 = vsel %vm1383, %v1368, 0.0
      %1388 = vadd.xlane.f32.xlu0 %v1387
      %v1389 = vpop.xlane.xlu0 %1388
      %v1390 = vsel %vm1383, %v1369, 0.0
      %1391 = vadd.xlane.f32.xlu0 %v1390
      %v1392 = vpop.xlane.xlu0 %1391
      %v1393 = vsel %vm1383, %v1370, 0.0
      %1394 = vadd.xlane.f32.xlu0 %v1393
      %v1395 = vpop.xlane.xlu0 %1394
      %v1396 = vsel %vm1383, %v1371, 0.0
      %1397 = vadd.xlane.f32.xlu0 %v1396
      %v1398 = vpop.xlane.xlu0 %1397
      %v1399 = vsel %vm1383, %v1372, 0.0
      %1400 = vadd.xlane.f32.xlu0 %v1399
      %v1401 = vpop.xlane.xlu0 %1400
      %v1402 = vsel %vm1383, %v1373, 0.0
      %1403 = vadd.xlane.f32.xlu0 %v1402
      %v1404 = vpop.xlane.xlu0 %1403
      %v1405 = vsel %vm1383, %v1374, 0.0
      %1406 = vadd.xlane.f32.xlu0 %v1405
      %v1407 = vpop.xlane.xlu0 %1406
      %v1408 = vsel %vm1383, %v1375, 0.0
      %1409 = vadd.xlane.f32.xlu0 %v1408
      %v1410 = vpop.xlane.xlu0 %1409
      %v1411 = vsel %vm1383, %v1376, 0.0
      %1412 = vadd.xlane.f32.xlu0 %v1411
      %v1413 = vpop.xlane.xlu0 %1412
      %v1414 = vsel %vm1383, %v1377, 0.0
      %1415 = vadd.xlane.f32.xlu0 %v1414
      %v1416 = vpop.xlane.xlu0 %1415
      %v1417 = vsel %vm1383, %v1378, 0.0
      %1418 = vadd.xlane.f32.xlu0 %v1417
      %v1419 = vpop.xlane.xlu0 %1418
      %v1420 = vsel %vm1383, %v1379, 0.0
      %1421 = vadd.xlane.f32.xlu0 %v1420
      %v1422 = vpop.xlane.xlu0 %1421
      %v1423 = vsel %vm1383, %v1380, 0.0
      %1424 = vadd.xlane.f32.xlu0 %v1423
      %v1425 = vpop.xlane.xlu0 %1424
      %v1426 = vsel %vm1383, %v1381, 0.0
      %1427 = vadd.xlane.f32.xlu0 %v1426
      %v1428 = vpop.xlane.xlu0 %1427
      %v1429 = vsel %vm1383, %v1382, 0.0
      %1430 = vadd.xlane.f32.xlu0 %v1429
      %v1431 = vpop.xlane.xlu0 %1430
      %v1432 = vpack.c.bf16 %v1160, %v1159
      %v1433 = vpack.c.bf16 %v1162, %v1161
      %v1434 = vpack.c.bf16 %v1164, %v1163
      %v1435 = vpack.c.bf16 %v1166, %v1165
      %v1436 = vpack.c.bf16 %v1168, %v1167
      %v1437 = vpack.c.bf16 %v1170, %v1169
      %v1438 = vpack.c.bf16 %v1172, %v1171
      %v1439 = vpack.c.bf16 %v1174, %v1173
      %v1440 = vld [vmem:[%s7] sm:$0xf]
      %v1441 = vld [vmem:[%s7 + $0x4] sm:$0xf]
      %v1442 = vld [vmem:[%s8] sm:$0x1]
      %v1444 = vlaneseq
      %v1445 = vshrl.u32 %v1444, 7
      %v1446 = vsub.s32 0, %v1445
      %v1447 = vrot.slane %v1442, %v1446
      %v1451 = vunpack.c.l.b16 %v1440
      %v1452 = vunpack.c.l.b16 %v1441
      %v1453 = vpack.c.b16 %v1452, %v1451
      %v1456 = vsel %vm1383, %v1432, 0
      %v1459 = vsel %vm1383, %v1433, 0
      %v1462 = vsel %vm1383, %v1434, 0
      %v1465 = vsel %vm1383, %v1435, 0
      %v1468 = vsel %vm1383, %v1436, 0
      %v1471 = vsel %vm1383, %v1437, 0
      %v1474 = vsel %vm1383, %v1438, 0
      %v1477 = vsel %vm1383, %v1439, 0
      %1479 = vmatprep.subr.bf16.mxu0 0
      %1480 = vmatpush1.bf16.msra.mxu0 %v1453
      %1481 = vmatprep.subr.bf16.mxu0 0
      %1482 = vmatpush1.bf16.msra.mxu0 0
      %1483 = vmatprep.subr.bf16.mxu0 0
      %1484 = vmatpush1.bf16.msra.mxu0 0
      %1485 = vmatprep.subr.bf16.mxu0 0
      %1486 = vmatpush1.bf16.msra.mxu0 0
      %1487 = vmatprep.subr.bf16.mxu0 0
      %1488 = vmatpush1.bf16.msra.mxu0 0
      %1489 = vmatprep.subr.bf16.mxu0 0
      %1490 = vmatpush1.bf16.msra.mxu0 0
      %1491 = vmatprep.subr.bf16.mxu0 0
      %1492 = vmatpush1.bf16.msra.mxu0 0
      %1493 = vmatprep.subr.bf16.mxu0 0
      %1494 = vmatpush1.bf16.msra.mxu0 0
      %1495 = vmatprep.subr.bf16.mxu0 0
      %1496 = vmatpush1.bf16.msra.mxu0 0
      %1497 = vmatprep.subr.bf16.mxu0 0
      %1498 = vmatpush1.bf16.msra.mxu0 0
      %1499 = vmatprep.subr.bf16.mxu0 0
      %1500 = vmatpush1.bf16.msra.mxu0 0
      %1501 = vmatprep.subr.bf16.mxu0 0
      %1502 = vmatpush1.bf16.msra.mxu0 0
      %1503 = vmatprep.subr.bf16.mxu0 0
      %1504 = vmatpush1.bf16.msra.mxu0 0
      %1505 = vmatprep.subr.bf16.mxu0 0
      %1506 = vmatpush1.bf16.msra.mxu0 0
      %1507 = vmatprep.subr.bf16.mxu0 0
      %1508 = vmatpush1.bf16.msra.mxu0 0
      %1509 = vmatprep.subr.bf16.mxu0 0
      %1510 = vmatpush1.bf16.msra.mxu0 0
      %1511 = vmatprep.mubr.bf16.mxu0 0
      %1512 = vmatmul.mubr.bf16.gmra.mrb[0].mxu0 %v1456
      %v1513 = vpop.f32.mrb[0].mxu0
      %v1514 = vadd.f32 %v1447, %v1513
      %v1515 = vpop.f32.mrb[0].mxu0
      %v1516 = vpop.f32.mrb[0].mxu0
      %v1517 = vadd.f32 %v1447, %v1516
      %v1518 = vpop.f32.mrb[0].mxu0
      %1519 = vmatprep.mubr.bf16.mxu0 0
      %1520 = vmatmul.mubr.bf16.gmra.mrb[0].mxu0 %v1459
      %v1521 = vpop.f32.mrb[0].mxu0
      %v1522 = vadd.f32 %v1447, %v1521
      %v1523 = vpop.f32.mrb[0].mxu0
      %v1524 = vpop.f32.mrb[0].mxu0
      %v1525 = vadd.f32 %v1447, %v1524
      %v1526 = vpop.f32.mrb[0].mxu0
      %1527 = vmatprep.mubr.bf16.mxu0 0
      %1528 = vmatmul.mubr.bf16.gmra.mrb[0].mxu0 %v1462
      %v1529 = vpop.f32.mrb[0].mxu0
      %v1530 = vadd.f32 %v1447, %v1529
      %v1531 = vpop.f32.mrb[0].mxu0
      %v1532 = vpop.f32.mrb[0].mxu0
      %v1533 = vadd.f32 %v1447, %v1532
      %v1534 = vpop.f32.mrb[0].mxu0
      %1535 = vmatprep.mubr.bf16.mxu0 0
      %1536 = vmatmul.mubr.bf16.gmra.mrb[0].mxu0 %v1465
      %v1537 = vpop.f32.mrb[0].mxu0
      %v1538 = vadd.f32 %v1447, %v1537
      %v1539 = vpop.f32.mrb[0].mxu0
      %v1540 = vpop.f32.mrb[0].mxu0
      %v1541 = vadd.f32 %v1447, %v1540
      %v1542 = vpop.f32.mrb[0].mxu0
      %1543 = vmatprep.mubr.bf16.mxu0 0
      %1544 = vmatmul.mubr.bf16.gmra.mrb[0].mxu0 %v1468
      %v1545 = vpop.f32.mrb[0].mxu0
      %v1546 = vadd.f32 %v1447, %v1545
      %v1547 = vpop.f32.mrb[0].mxu0
      %v1548 = vpop.f32.mrb[0].mxu0
      %v1549 = vadd.f32 %v1447, %v1548
      %v1550 = vpop.f32.mrb[0].mxu0
      %1551 = vmatprep.mubr.bf16.mxu0 0
      %1552 = vmatmul.mubr.bf16.gmra.mrb[0].mxu0 %v1471
      %v1553 = vpop.f32.mrb[0].mxu0
      %v1554 = vadd.f32 %v1447, %v1553
      %v1555 = vpop.f32.mrb[0].mxu0
      %v1556 = vpop.f32.mrb[0].mxu0
      %v1557 = vadd.f32 %v1447, %v1556
      %v1558 = vpop.f32.mrb[0].mxu0
      %1559 = vmatprep.mubr.bf16.mxu0 0
      %1560 = vmatmul.mubr.bf16.gmra.mrb[0].mxu0 %v1474
      %v1561 = vpop.f32.mrb[0].mxu0
      %v1562 = vadd.f32 %v1447, %v1561
      %v1563 = vpop.f32.mrb[0].mxu0
      %v1564 = vpop.f32.mrb[0].mxu0
      %v1565 = vadd.f32 %v1447, %v1564
      %v1566 = vpop.f32.mrb[0].mxu0
      %1567 = vmatprep.mubr.bf16.mxu0 0
      %1568 = vmatmul.mubr.bf16.gmra.mrb[0].mxu0 %v1477
      %v1569 = vpop.f32.mrb[0].mxu0
      %v1570 = vadd.f32 %v1447, %v1569
      %v1571 = vpop.f32.mrb[0].mxu0
      %v1572 = vpop.f32.mrb[0].mxu0
      %v1573 = vadd.f32 %v1447, %v1572
      %v1574 = vpop.f32.mrb[0].mxu0
      %1575 = vdwg.mxu0
      %v1576 = vmax.f32 %v1514, 0.0
      %v1577 = vmax.f32 %v1517, 0.0
      %v1578 = vmax.f32 %v1522, 0.0
      %v1579 = vmax.f32 %v1525, 0.0
      %v1580 = vmax.f32 %v1530, 0.0
      %v1581 = vmax.f32 %v1533, 0.0
      %v1582 = vmax.f32 %v1538, 0.0
      %v1583 = vmax.f32 %v1541, 0.0
      %v1584 = vmax.f32 %v1546, 0.0
      %v1585 = vmax.f32 %v1549, 0.0
      %v1586 = vmax.f32 %v1554, 0.0
      %v1587 = vmax.f32 %v1557, 0.0
      %v1588 = vmax.f32 %v1562, 0.0
      %v1589 = vmax.f32 %v1565, 0.0
      %v1590 = vmax.f32 %v1570, 0.0
      %v1591 = vmax.f32 %v1573, 0.0
      %v1592 = vpack.c.bf16 %v1577, %v1576
      %v1593 = vpack.c.bf16 %v1579, %v1578
      %v1594 = vpack.c.bf16 %v1581, %v1580
      %v1595 = vpack.c.bf16 %v1583, %v1582
      %v1596 = vpack.c.bf16 %v1585, %v1584
      %v1597 = vpack.c.bf16 %v1587, %v1586
      %v1598 = vpack.c.bf16 %v1589, %v1588
      %v1599 = vpack.c.bf16 %v1591, %v1590
      %v1600 = vld [vmem:[%s9] sm:$0xf]
      %v1601 = vld [vmem:[%s9 + $0x4] sm:$0xf]
      %v1602 = vld [vmem:[%s9 + $0x8] sm:$0xf]
      %v1603 = vld [vmem:[%s9 + $0xc] sm:$0xf]
      %v1604 = vld [vmem:[%s10] sm:$0x1]
      %v1606 = vlaneseq
      %v1607 = vshrl.u32 %v1606, 7
      %v1608 = vsub.s32 0, %v1607
      %v1609 = vrot.slane %v1604, %v1608
      %v1615 = vunpack.c.l.b16 %v1600
      %v1616 = vunpack.c.l.b16 %v1601
      %v1617 = vunpack.c.l.b16 %v1602
      %v1618 = vunpack.c.l.b16 %v1603
      %v1619 = vpack.c.b16 %v1616, %v1615
      %v1620 = vpack.c.b16 %v1618, %v1617
      %v1624 = vsel %vm492, %v1592, 0
      %v1627 = vsel %vm492, %v1593, 0
      %v1630 = vsel %vm492, %v1594, 0
      %v1633 = vsel %vm492, %v1595, 0
      %v1636 = vsel %vm492, %v1596, 0
      %v1639 = vsel %vm492, %v1597, 0
      %v1642 = vsel %vm492, %v1598, 0
      %v1645 = vsel %vm492, %v1599, 0
      %1647 = vmatprep.subr.bf16.mxu0 0
      %1648 = vmatpush1.bf16.msra.mxu0 %v1619
      %1649 = vmatprep.subr.bf16.mxu0 0
      %1650 = vmatpush1.bf16.msra.mxu0 %v1620
      %1651 = vmatprep.subr.bf16.mxu0 0
      %1652 = vmatpush1.bf16.msra.mxu0 0
      %1653 = vmatprep.subr.bf16.mxu0 0
      %1654 = vmatpush1.bf16.msra.mxu0 0
      %1655 = vmatprep.subr.bf16.mxu0 0
      %1656 = vmatpush1.bf16.msra.mxu0 0
      %1657 = vmatprep.subr.bf16.mxu0 0
      %1658 = vmatpush1.bf16.msra.mxu0 0
      %1659 = vmatprep.subr.bf16.mxu0 0
      %1660 = vmatpush1.bf16.msra.mxu0 0
      %1661 = vmatprep.subr.bf16.mxu0 0
      %1662 = vmatpush1.bf16.msra.mxu0 0
      %1663 = vmatprep.subr.bf16.mxu0 0
      %1664 = vmatpush1.bf16.msra.mxu0 0
      %1665 = vmatprep.subr.bf16.mxu0 0
      %1666 = vmatpush1.bf16.msra.mxu0 0
      %1667 = vmatprep.subr.bf16.mxu0 0
      %1668 = vmatpush1.bf16.msra.mxu0 0
      %1669 = vmatprep.subr.bf16.mxu0 0
      %1670 = vmatpush1.bf16.msra.mxu0 0
      %1671 = vmatprep.subr.bf16.mxu0 0
      %1672 = vmatpush1.bf16.msra.mxu0 0
      %1673 = vmatprep.subr.bf16.mxu0 0
      %1674 = vmatpush1.bf16.msra.mxu0 0
      %1675 = vmatprep.subr.bf16.mxu0 0
      %1676 = vmatpush1.bf16.msra.mxu0 0
      %1677 = vmatprep.subr.bf16.mxu0 0
      %1678 = vmatpush1.bf16.msra.mxu0 0
      %1679 = vmatprep.mubr.bf16.mxu0 0
      %1680 = vmatmul.mubr.bf16.gmra.mrb[0].mxu0 %v1624
      %v1681 = vpop.f32.mrb[0].mxu0
      %v1682 = vadd.f32 %v1609, %v1681
      %v1683 = vpop.f32.mrb[0].mxu0
      %v1684 = vpop.f32.mrb[0].mxu0
      %v1685 = vadd.f32 %v1609, %v1684
      %v1686 = vpop.f32.mrb[0].mxu0
      %1687 = vmatprep.mubr.bf16.mxu0 0
      %1688 = vmatmul.mubr.bf16.gmra.mrb[0].mxu0 %v1627
      %v1689 = vpop.f32.mrb[0].mxu0
      %v1690 = vadd.f32 %v1609, %v1689
      %v1691 = vpop.f32.mrb[0].mxu0
      %v1692 = vpop.f32.mrb[0].mxu0
      %v1693 = vadd.f32 %v1609, %v1692
      %v1694 = vpop.f32.mrb[0].mxu0
      %1695 = vmatprep.mubr.bf16.mxu0 0
      %1696 = vmatmul.mubr.bf16.gmra.mrb[0].mxu0 %v1630
      %v1697 = vpop.f32.mrb[0].mxu0
      %v1698 = vadd.f32 %v1609, %v1697
      %v1699 = vpop.f32.mrb[0].mxu0
      %v1700 = vpop.f32.mrb[0].mxu0
      %v1701 = vadd.f32 %v1609, %v1700
      %v1702 = vpop.f32.mrb[0].mxu0
      %1703 = vmatprep.mubr.bf16.mxu0 0
      %1704 = vmatmul.mubr.bf16.gmra.mrb[0].mxu0 %v1633
      %v1705 = vpop.f32.mrb[0].mxu0
      %v1706 = vadd.f32 %v1609, %v1705
      %v1707 = vpop.f32.mrb[0].mxu0
      %v1708 = vpop.f32.mrb[0].mxu0
      %v1709 = vadd.f32 %v1609, %v1708
      %v1710 = vpop.f32.mrb[0].mxu0
      %1711 = vmatprep.mubr.bf16.mxu0 0
      %1712 = vmatmul.mubr.bf16.gmra.mrb[0].mxu0 %v1636
      %v1713 = vpop.f32.mrb[0].mxu0
      %v1714 = vadd.f32 %v1609, %v1713
      %v1715 = vpop.f32.mrb[0].mxu0
      %v1716 = vpop.f32.mrb[0].mxu0
      %v1717 = vadd.f32 %v1609, %v1716
      %v1718 = vpop.f32.mrb[0].mxu0
      %1719 = vmatprep.mubr.bf16.mxu0 0
      %1720 = vmatmul.mubr.bf16.gmra.mrb[0].mxu0 %v1639
      %v1721 = vpop.f32.mrb[0].mxu0
      %v1722 = vadd.f32 %v1609, %v1721
      %v1723 = vpop.f32.mrb[0].mxu0
      %v1724 = vpop.f32.mrb[0].mxu0
      %v1725 = vadd.f32 %v1609, %v1724
      %v1726 = vpop.f32.mrb[0].mxu0
      %1727 = vmatprep.mubr.bf16.mxu0 0
      %1728 = vmatmul.mubr.bf16.gmra.mrb[0].mxu0 %v1642
      %v1729 = vpop.f32.mrb[0].mxu0
      %v1730 = vadd.f32 %v1609, %v1729
      %v1731 = vpop.f32.mrb[0].mxu0
      %v1732 = vpop.f32.mrb[0].mxu0
      %v1733 = vadd.f32 %v1609, %v1732
      %v1734 = vpop.f32.mrb[0].mxu0
      %1735 = vmatprep.mubr.bf16.mxu0 0
      %1736 = vmatmul.mubr.bf16.gmra.mrb[0].mxu0 %v1645
      %v1737 = vpop.f32.mrb[0].mxu0
      %v1738 = vadd.f32 %v1609, %v1737
      %v1739 = vpop.f32.mrb[0].mxu0
      %v1740 = vpop.f32.mrb[0].mxu0
      %v1741 = vadd.f32 %v1609, %v1740
      %v1742 = vpop.f32.mrb[0].mxu0
      %1743 = vdwg.mxu0
      %v1744 = vmax.f32 %v1682, 0.0
      %v1745 = vmax.f32 %v1685, 0.0
      %v1746 = vmax.f32 %v1690, 0.0
      %v1747 = vmax.f32 %v1693, 0.0
      %v1748 = vmax.f32 %v1698, 0.0
      %v1749 = vmax.f32 %v1701, 0.0
      %v1750 = vmax.f32 %v1706, 0.0
      %v1751 = vmax.f32 %v1709, 0.0
      %v1752 = vmax.f32 %v1714, 0.0
      %v1753 = vmax.f32 %v1717, 0.0
      %v1754 = vmax.f32 %v1722, 0.0
      %v1755 = vmax.f32 %v1725, 0.0
      %v1756 = vmax.f32 %v1730, 0.0
      %v1757 = vmax.f32 %v1733, 0.0
      %v1758 = vmax.f32 %v1738, 0.0
      %v1759 = vmax.f32 %v1741, 0.0
      %v1760 = vpack.c.bf16 %v1745, %v1744
      %v1761 = vpack.c.bf16 %v1747, %v1746
      %v1762 = vpack.c.bf16 %v1749, %v1748
      %v1763 = vpack.c.bf16 %v1751, %v1750
      %v1764 = vpack.c.bf16 %v1753, %v1752
      %v1765 = vpack.c.bf16 %v1755, %v1754
      %v1766 = vpack.c.bf16 %v1757, %v1756
      %v1767 = vpack.c.bf16 %v1759, %v1758
      %v1768 = vld [vmem:[%s11] sm:$0xf]
      %v1769 = vld [vmem:[%s11 + $0x4] sm:$0xf]
      %v1770 = vld [vmem:[%s11 + $0x8] sm:$0xf]
      %v1771 = vld [vmem:[%s11 + $0xc] sm:$0xf]
      %v1772 = vld [vmem:[%s11 + $0x10] sm:$0xf]
      %v1773 = vld [vmem:[%s11 + $0x14] sm:$0xf]
      %v1774 = vld [vmem:[%s11 + $0x18] sm:$0xf]
      %v1775 = vld [vmem:[%s11 + $0x1c] sm:$0xf]
      %v1776 = vld [vmem:[%s12] sm:$0x1]
      %v1778 = vlaneseq
      %v1779 = vshrl.u32 %v1778, 7
      %v1780 = vsub.s32 0, %v1779
      %v1781 = vrot.slane %v1776, %v1780
      %v1791 = vunpack.c.l.b16 %v1768
      %v1792 = vunpack.c.l.b16 %v1769
      %v1793 = vunpack.c.l.b16 %v1770
      %v1794 = vunpack.c.l.b16 %v1771
      %v1795 = vunpack.c.l.b16 %v1772
      %v1796 = vunpack.c.l.b16 %v1773
      %v1797 = vunpack.c.l.b16 %v1774
      %v1798 = vunpack.c.l.b16 %v1775
      %v1799 = vpack.c.b16 %v1792, %v1791
      %v1800 = vpack.c.b16 %v1794, %v1793
      %v1801 = vpack.c.b16 %v1796, %v1795
      %v1802 = vpack.c.b16 %v1798, %v1797
      %v1808 = vsel %vm677, %v1760, 0
      %v1811 = vsel %vm677, %v1761, 0
      %v1814 = vsel %vm677, %v1762, 0
      %v1817 = vsel %vm677, %v1763, 0
      %v1820 = vsel %vm677, %v1764, 0
      %v1823 = vsel %vm677, %v1765, 0
      %v1826 = vsel %vm677, %v1766, 0
      %v1829 = vsel %vm677, %v1767, 0
      %1831 = vmatprep.subr.bf16.mxu0 0
      %1832 = vmatpush1.bf16.msra.mxu0 %v1799
      %1833 = vmatprep.subr.bf16.mxu0 0
      %1834 = vmatpush1.bf16.msra.mxu0 %v1800
      %1835 = vmatprep.subr.bf16.mxu0 0
      %1836 = vmatpush1.bf16.msra.mxu0 %v1801
      %1837 = vmatprep.subr.bf16.mxu0 0
      %1838 = vmatpush1.bf16.msra.mxu0 %v1802
      %1839 = vmatprep.subr.bf16.mxu0 0
      %1840 = vmatpush1.bf16.msra.mxu0 0
      %1841 = vmatprep.subr.bf16.mxu0 0
      %1842 = vmatpush1.bf16.msra.mxu0 0
      %1843 = vmatprep.subr.bf16.mxu0 0
      %1844 = vmatpush1.bf16.msra.mxu0 0
      %1845 = vmatprep.subr.bf16.mxu0 0
      %1846 = vmatpush1.bf16.msra.mxu0 0
      %1847 = vmatprep.subr.bf16.mxu0 0
      %1848 = vmatpush1.bf16.msra.mxu0 0
      %1849 = vmatprep.subr.bf16.mxu0 0
      %1850 = vmatpush1.bf16.msra.mxu0 0
      %1851 = vmatprep.subr.bf16.mxu0 0
      %1852 = vmatpush1.bf16.msra.mxu0 0
      %1853 = vmatprep.subr.bf16.mxu0 0
      %1854 = vmatpush1.bf16.msra.mxu0 0
      %1855 = vmatprep.subr.bf16.mxu0 0
      %1856 = vmatpush1.bf16.msra.mxu0 0
      %1857 = vmatprep.subr.bf16.mxu0 0
      %1858 = vmatpush1.bf16.msra.mxu0 0
      %1859 = vmatprep.subr.bf16.mxu0 0
      %1860 = vmatpush1.bf16.msra.mxu0 0
      %1861 = vmatprep.subr.bf16.mxu0 0
      %1862 = vmatpush1.bf16.msra.mxu0 0
      %1863 = vmatprep.mubr.bf16.mxu0 0
      %1864 = vmatmul.mubr.bf16.gmra.mrb[0].mxu0 %v1808
      %v1865 = vpop.f32.mrb[0].mxu0
      %v1866 = vadd.f32 %v1781, %v1865
      %v1867 = vpop.f32.mrb[0].mxu0
      %v1868 = vpop.f32.mrb[0].mxu0
      %v1869 = vadd.f32 %v1781, %v1868
      %v1870 = vpop.f32.mrb[0].mxu0
      %1871 = vmatprep.mubr.bf16.mxu0 0
      %1872 = vmatmul.mubr.bf16.gmra.mrb[0].mxu0 %v1811
      %v1873 = vpop.f32.mrb[0].mxu0
      %v1874 = vadd.f32 %v1781, %v1873
      %v1875 = vpop.f32.mrb[0].mxu0
      %v1876 = vpop.f32.mrb[0].mxu0
      %v1877 = vadd.f32 %v1781, %v1876
      %v1878 = vpop.f32.mrb[0].mxu0
      %1879 = vmatprep.mubr.bf16.mxu0 0
      %1880 = vmatmul.mubr.bf16.gmra.mrb[0].mxu0 %v1814
      %v1881 = vpop.f32.mrb[0].mxu0
      %v1882 = vadd.f32 %v1781, %v1881
      %v1883 = vpop.f32.mrb[0].mxu0
      %v1884 = vpop.f32.mrb[0].mxu0
      %v1885 = vadd.f32 %v1781, %v1884
      %v1886 = vpop.f32.mrb[0].mxu0
      %1887 = vmatprep.mubr.bf16.mxu0 0
      %1888 = vmatmul.mubr.bf16.gmra.mrb[0].mxu0 %v1817
      %v1889 = vpop.f32.mrb[0].mxu0
      %v1890 = vadd.f32 %v1781, %v1889
      %v1891 = vpop.f32.mrb[0].mxu0
      %v1892 = vpop.f32.mrb[0].mxu0
      %v1893 = vadd.f32 %v1781, %v1892
      %v1894 = vpop.f32.mrb[0].mxu0
      %1895 = vmatprep.mubr.bf16.mxu0 0
      %1896 = vmatmul.mubr.bf16.gmra.mrb[0].mxu0 %v1820
      %v1897 = vpop.f32.mrb[0].mxu0
      %v1898 = vadd.f32 %v1781, %v1897
      %v1899 = vpop.f32.mrb[0].mxu0
      %v1900 = vpop.f32.mrb[0].mxu0
      %v1901 = vadd.f32 %v1781, %v1900
      %v1902 = vpop.f32.mrb[0].mxu0
      %1903 = vmatprep.mubr.bf16.mxu0 0
      %1904 = vmatmul.mubr.bf16.gmra.mrb[0].mxu0 %v1823
      %v1905 = vpop.f32.mrb[0].mxu0
      %v1906 = vadd.f32 %v1781, %v1905
      %v1907 = vpop.f32.mrb[0].mxu0
      %v1908 = vpop.f32.mrb[0].mxu0
      %v1909 = vadd.f32 %v1781, %v1908
      %v1910 = vpop.f32.mrb[0].mxu0
      %1911 = vmatprep.mubr.bf16.mxu0 0
      %1912 = vmatmul.mubr.bf16.gmra.mrb[0].mxu0 %v1826
      %v1913 = vpop.f32.mrb[0].mxu0
      %v1914 = vadd.f32 %v1781, %v1913
      %v1915 = vpop.f32.mrb[0].mxu0
      %v1916 = vpop.f32.mrb[0].mxu0
      %v1917 = vadd.f32 %v1781, %v1916
      %v1918 = vpop.f32.mrb[0].mxu0
      %1919 = vmatprep.mubr.bf16.mxu0 0
      %1920 = vmatmul.mubr.bf16.gmra.mrb[0].mxu0 %v1829
      %v1921 = vpop.f32.mrb[0].mxu0
      %v1922 = vadd.f32 %v1781, %v1921
      %v1923 = vpop.f32.mrb[0].mxu0
      %v1924 = vpop.f32.mrb[0].mxu0
      %v1925 = vadd.f32 %v1781, %v1924
      %v1926 = vpop.f32.mrb[0].mxu0
      %1927 = vdwg.mxu0
      %v1928 = vxor.u32 %v1866, 2147483648
      %v1929 = vxor.u32 %v1869, 2147483648
      %v1930 = vxor.u32 %v1874, 2147483648
      %v1931 = vxor.u32 %v1877, 2147483648
      %v1932 = vxor.u32 %v1882, 2147483648
      %v1933 = vxor.u32 %v1885, 2147483648
      %v1934 = vxor.u32 %v1890, 2147483648
      %v1935 = vxor.u32 %v1893, 2147483648
      %v1936 = vxor.u32 %v1898, 2147483648
      %v1937 = vxor.u32 %v1901, 2147483648
      %v1938 = vxor.u32 %v1906, 2147483648
      %v1939 = vxor.u32 %v1909, 2147483648
      %v1940 = vxor.u32 %v1914, 2147483648
      %v1941 = vxor.u32 %v1917, 2147483648
      %v1942 = vxor.u32 %v1922, 2147483648
      %v1943 = vxor.u32 %v1925, 2147483648
      %v1944 = vmul.f32 %v1928, 1.442695
      %v1945 = vpow.pop %v1944
      %v1946 = vmul.f32 %v1929, 1.442695
      %v1947 = vpow.pop %v1946
      %v1948 = vmul.f32 %v1930, 1.442695
      %v1949 = vpow.pop %v1948
      %v1950 = vmul.f32 %v1931, 1.442695
      %v1951 = vpow.pop %v1950
      %v1952 = vmul.f32 %v1932, 1.442695
      %v1953 = vpow.pop %v1952
      %v1954 = vmul.f32 %v1933, 1.442695
      %v1955 = vpow.pop %v1954
      %v1956 = vmul.f32 %v1934, 1.442695
      %v1957 = vpow.pop %v1956
      %v1958 = vmul.f32 %v1935, 1.442695
      %v1959 = vpow.pop %v1958
      %v1960 = vmul.f32 %v1936, 1.442695
      %v1961 = vpow.pop %v1960
      %v1962 = vmul.f32 %v1937, 1.442695
      %v1963 = vpow.pop %v1962
      %v1964 = vmul.f32 %v1938, 1.442695
      %v1965 = vpow.pop %v1964
      %v1966 = vmul.f32 %v1939, 1.442695
      %v1967 = vpow.pop %v1966
      %v1968 = vmul.f32 %v1940, 1.442695
      %v1969 = vpow.pop %v1968
      %v1970 = vmul.f32 %v1941, 1.442695
      %v1971 = vpow.pop %v1970
      %v1972 = vmul.f32 %v1942, 1.442695
      %v1973 = vpow.pop %v1972
      %v1974 = vmul.f32 %v1943, 1.442695
      %v1975 = vpow.pop %v1974
      %v1976 = vadd.f32 %v1945, 1.0
      %v1977 = vadd.f32 %v1947, 1.0
      %v1978 = vadd.f32 %v1949, 1.0
      %v1979 = vadd.f32 %v1951, 1.0
      %v1980 = vadd.f32 %v1953, 1.0
      %v1981 = vadd.f32 %v1955, 1.0
      %v1982 = vadd.f32 %v1957, 1.0
      %v1983 = vadd.f32 %v1959, 1.0
      %v1984 = vadd.f32 %v1961, 1.0
      %v1985 = vadd.f32 %v1963, 1.0
      %v1986 = vadd.f32 %v1965, 1.0
      %v1987 = vadd.f32 %v1967, 1.0
      %v1988 = vadd.f32 %v1969, 1.0
      %v1989 = vadd.f32 %v1971, 1.0
      %v1990 = vadd.f32 %v1973, 1.0
      %v1991 = vadd.f32 %v1975, 1.0
      %v1992 = vrcp.pop %v1976
      %v1993 = vmul.f32 1.0, %v1992
      %v1994 = vrcp.pop %v1977
      %v1995 = vmul.f32 1.0, %v1994
      %v1996 = vrcp.pop %v1978
      %v1997 = vmul.f32 1.0, %v1996
      %v1998 = vrcp.pop %v1979
      %v1999 = vmul.f32 1.0, %v1998
      %v2000 = vrcp.pop %v1980
      %v2001 = vmul.f32 1.0, %v2000
      %v2002 = vrcp.pop %v1981
      %v2003 = vmul.f32 1.0, %v2002
      %v2004 = vrcp.pop %v1982
      %v2005 = vmul.f32 1.0, %v2004
      %v2006 = vrcp.pop %v1983
      %v2007 = vmul.f32 1.0, %v2006
      %v2008 = vrcp.pop %v1984
      %v2009 = vmul.f32 1.0, %v2008
      %v2010 = vrcp.pop %v1985
      %v2011 = vmul.f32 1.0, %v2010
      %v2012 = vrcp.pop %v1986
      %v2013 = vmul.f32 1.0, %v2012
      %v2014 = vrcp.pop %v1987
      %v2015 = vmul.f32 1.0, %v2014
      %v2016 = vrcp.pop %v1988
      %v2017 = vmul.f32 1.0, %v2016
      %v2018 = vrcp.pop %v1989
      %v2019 = vmul.f32 1.0, %v2018
      %v2020 = vrcp.pop %v1990
      %v2021 = vmul.f32 1.0, %v2020
      %v2022 = vrcp.pop %v1991
      %v2023 = vmul.f32 1.0, %v2022
      %v2024 = vlaneseq
      %v2025 = vand.u32 %v2024, 127
      %vm2026 = vcmp.eq.s32.totalorder %v2025, 32
      %v2027 = vsel %vm2026, %v1386, %v1993
      %v2028 = vsel %vm2026, %v1389, %v1995
      %v2029 = vsel %vm2026, %v1392, %v1997
      %v2030 = vsel %vm2026, %v1395, %v1999
      %v2031 = vsel %vm2026, %v1398, %v2001
      %v2032 = vsel %vm2026, %v1401, %v2003
      %v2033 = vsel %vm2026, %v1404, %v2005
      %v2034 = vsel %vm2026, %v1407, %v2007
      %v2035 = vsel %vm2026, %v1410, %v2009
      %v2036 = vsel %vm2026, %v1413, %v2011
      %v2037 = vsel %vm2026, %v1416, %v2013
      %v2038 = vsel %vm2026, %v1419, %v2015
      %v2039 = vsel %vm2026, %v1422, %v2017
      %v2040 = vsel %vm2026, %v1425, %v2019
      %v2041 = vsel %vm2026, %v1428, %v2021
      %v2042 = vsel %vm2026, %v1431, %v2023
      %2043 = vst [vmem:[%s442] sm:$0xff] %v2027
      %2044 = vst [vmem:[%s442 + $0x8] sm:$0xff] %v2028
      %2045 = vst [vmem:[%s442 + $0x10] sm:$0xff] %v2029
      %2046 = vst [vmem:[%s442 + $0x18] sm:$0xff] %v2030
      %2047 = vst [vmem:[%s442 + $0x20] sm:$0xff] %v2031
      %2048 = vst [vmem:[%s442 + $0x28] sm:$0xff] %v2032
      %2049 = vst [vmem:[%s442 + $0x30] sm:$0xff] %v2033
      %2050 = vst [vmem:[%s442 + $0x38] sm:$0xff] %v2034
      %2051 = vst [vmem:[%s442 + $0x40] sm:$0xff] %v2035
      %2052 = vst [vmem:[%s442 + $0x48] sm:$0xff] %v2036
      %2053 = vst [vmem:[%s442 + $0x50] sm:$0xff] %v2037
      %2054 = vst [vmem:[%s442 + $0x58] sm:$0xff] %v2038
      %2055 = vst [vmem:[%s442 + $0x60] sm:$0xff] %v2039
      %2056 = vst [vmem:[%s442 + $0x68] sm:$0xff] %v2040
      %2057 = vst [vmem:[%s442 + $0x70] sm:$0xff] %v2041
      %2058 = vst [vmem:[%s442 + $0x78] sm:$0xff] %v2042
      %s2059 = smul.u32 16, %s24
      %p2060 = scmp.lt.s32.totalorder %s2059, 31
      %s2061 = scalar_select %p2060, %s2059, 31
      %s2062 = smul.addr %s2061, 8
      %s2063 = scalar_lea.vmem %s13, %s2062
      // Predicated region
      $region73: #{_vae_forward_impl.1} parent=71 // pred_check
        %p2064 = pneg %p320
      $region74: #{_vae_forward_impl.1} parent=71 // pred_check_branch
        %2066 = sbr.rel (%p2064) target = $region76
      $region75: #{_vae_forward_impl.1} parent=71 // pred_region
        %s2067 = smul.u32 16, %s24
      $region76: #{_vae_forward_impl.1} parent=71 // pred_fallthru
        _
    $region72: #{_vae_forward_impl.1} parent=5 // pred_fallthru
      _
    %p2068 = scmp.le.s32.totalorder 2, %s19
    // Predicated region
    $region77: #{_vae_forward_impl.1} parent=5 // pred_check
      %p2069 = pneg %p2068
    $region78: #{_vae_forward_impl.1} parent=5 // pred_check_branch
      %2071 = sbr.rel (%p2069) target = $region80
    $region79: #{_vae_forward_impl.1} parent=5 // pred_region
      %s2072 = ssub.s32 %s19, 2
      // Predicated region
      $region81: #{_vae_forward_impl.1} parent=79 // pred_check
        %p2073 = pneg %p326
      $region82: #{_vae_forward_impl.1} parent=79 // pred_check_branch
        %2075 = sbr.rel (%p2073) target = $region84
      $region83: #{_vae_forward_impl.1} parent=79 // pred_region
        %s2076 = smul.u32 16, %s25
        %p2077 = scmp.lt.s32.totalorder %s2076, 31
        %s2078 = scalar_select %p2077, %s2076, 31
        %s2079 = smul.addr %s2078, 8
        %s2080 = scalar_lea.vmem %s13, %s2079
      $region84: #{_vae_forward_impl.1} parent=79 // pred_fallthru
        _
    $region80: #{_vae_forward_impl.1} parent=5 // pred_fallthru
      _
  $region6: #{_vae_forward_impl.1} parent=0 // loop_footer
    %s23 = sadd.s32 1, %s19
  $region7: #{_vae_forward_impl.1} parent=0 // loop_footer_branch
    %18 = sbr.rel target = $region3
  $region8: #{_vae_forward_impl.1} parent=0 // loop_exit
    _

</llo_original>
